<compile_context>
chip_gen: v6e
topology: v6e:2x2x1
jax: 0.10.0
libtpu: 0.0.40
codegen_flags: <defaults>
</compile_context>

<pallas_src>
import functools

import jax
import jax.numpy as jnp
from jax import lax
from jax.experimental import pallas as pl
from jax.experimental.pallas import tpu as pltpu


def _round_up(x, m):
    return (x + m - 1) // m * m


# ----------------------------------------------------------------------------
# Kernel: full GRU recurrence + final FC in a single invocation.
# ----------------------------------------------------------------------------
def gru_fc_kernel(x_ref, wih_ref, whh_ref, bgi_ref, bhn_ref, wfc_ref, bfc_ref,
                  out_ref, gi_ref, *, seq_len, batch):
    """
    x_ref   : (T*Bp, I)   bf16  embedded tokens, time-major, batch padded
    wih_ref : (I,  3*Hp)  bf16  input->gate weights, gate order [r|z|n]
    whh_ref : (Hp, 3*Hp)  bf16  hidden->gate weights (zero-padded rows)
    bgi_ref : (1,  3*Hp)  f32   [b_ir+b_hr | b_iz+b_hz | b_in]
    bhn_ref : (1,  Hp)    f32   b_hn (must stay inside r*(...))
    wfc_ref : (Hp, 128)   bf16  FC weights (real logits in cols [:C])
    bfc_ref : (1,  128)   f32
    out_ref : (Bp, 128)   f32
    gi_ref  : (T*Bp, 3*Hp) f32  VMEM scratch for the hoisted input projection
    """
    hp = whh_ref.shape[0]

    # Phase 1: input projection for all timesteps at once (one MXU matmul),
    # combined input-side bias folded in.  Result parked in VMEM scratch so it
    # does not occupy vregs across the whole recurrence.
    gi_ref[...] = (jnp.dot(x_ref[...], wih_ref[...],
                           preferred_element_type=jnp.float32) + bgi_ref[...])

    # Hoist the b_hn broadcast out of the loop (JAX does not CSE broadcasts).
    b_hn = jnp.broadcast_to(bhn_ref[...], (batch, hp))

    # Phase 2: sequential recurrence; h carried in registers, big operands
    # (gi, W_hh) stay behind refs and are loaded per step.
    def step(t, h):
        row = pl.multiple_of(t * batch, 8)
        gi = gi_ref[pl.ds(row, batch), :]                           # (Bp, 3Hp)
        gh = jnp.dot(h.astype(jnp.bfloat16), whh_ref[...],
                     preferred_element_type=jnp.float32)            # (Bp, 3Hp)
        # r and z share one contiguous, lane-aligned sigmoid.
        rz = jax.nn.sigmoid(gi[:, :2 * hp] + gh[:, :2 * hp])
        r, z = rz[:, :hp], rz[:, hp:]
        n = jnp.tanh(gi[:, 2 * hp:] + r * (gh[:, 2 * hp:] + b_hn))
        return (1.0 - z) * n + z * h

    h0 = jnp.zeros((batch, hp), jnp.float32)
    h = lax.fori_loop(0, seq_len, step, h0, unroll=True)

    # Phase 3: final FC on the last hidden state -> lane-dense (Bp,128) store.
    out_ref[...] = (jnp.dot(h.astype(jnp.bfloat16), wfc_ref[...],
                            preferred_element_type=jnp.float32)
                    + bfc_ref[...]).astype(out_ref.dtype)


# ----------------------------------------------------------------------------
# One-time parameter preparation (padding / bias folding / bf16 casts).
# ----------------------------------------------------------------------------
def prepare_params(params, *, lane=128):
    H = params["w_hh"].shape[0]
    C = params["w_fc"].shape[1]
    Hp = _round_up(H, lane)
    Cp = _round_up(C, lane)

    def pad_gates(w):  # (..., 3H) -> (..., 3Hp): pad each gate to Hp lanes
        parts = []
        for g in range(3):
            p = w[..., g * H:(g + 1) * H]
            parts.append(jnp.pad(p, [(0, 0)] * (w.ndim - 1) + [(0, Hp - H)]))
        return jnp.concatenate(parts, axis=-1)

    b_ih, b_hh = params["b_ih"], params["b_hh"]
    b_gi = jnp.concatenate([b_ih[0:H] + b_hh[0:H],          # r: fold both
                            b_ih[H:2 * H] + b_hh[H:2 * H],  # z: fold both
                            b_ih[2 * H:3 * H]])             # n: input side only

    return {
        "embedding": params["embedding"].astype(jnp.bfloat16),            # (V, I)
        "w_ih": pad_gates(params["w_ih"]).astype(jnp.bfloat16),           # (I, 3Hp)
        "w_hh": jnp.pad(pad_gates(params["w_hh"]),
                        ((0, Hp - H), (0, 0))).astype(jnp.bfloat16),      # (Hp, 3Hp)
        "b_gi": pad_gates(b_gi.reshape(1, 3 * H)).astype(jnp.float32),    # (1, 3Hp)
        "b_hn": jnp.pad(b_hh[2 * H:3 * H].reshape(1, H),
                        ((0, 0), (0, Hp - H))).astype(jnp.float32),       # (1, Hp)
        "w_fc": jnp.pad(params["w_fc"],
                        ((0, Hp - H), (0, Cp - C))).astype(jnp.bfloat16), # (Hp, Cp)
        "b_fc": jnp.pad(params["b_fc"].reshape(1, C),
                        ((0, 0), (0, Cp - C))).astype(jnp.float32),       # (1, Cp)
    }


# ----------------------------------------------------------------------------
# Forward pass: token gather + single pallas_call.
# ----------------------------------------------------------------------------
def gru1_forward(tokens, p, num_classes=4):
    """tokens: int32 (B, T). p: prepare_params() output. Returns (B, C) f32."""
    emb = p["embedding"]                           # (V, I) bf16
    B, T = tokens.shape
    I = emb.shape[1]
    Hp = p["w_hh"].shape[0]
    Cp = p["w_fc"].shape[1]
    Bp = _round_up(max(B, 8), 8)

    # TODO(synk): embedding lookup is a data-dependent gather; kept as plain
    # JAX (time-major so no big transpose) rather than an in-kernel DMA gather.
    tok = jnp.pad(tokens.T, ((0, 0), (0, Bp - B)))        # (T, Bp) time-major
    x2d = jnp.take(emb, tok.reshape(T * Bp), axis=0)      # (T*Bp, I) bf16

    kernel = functools.partial(gru_fc_kernel, seq_len=T, batch=Bp)

    out = pl.pallas_call(
        kernel,
        out_shape=jax.ShapeDtypeStruct((Bp, Cp), jnp.float32),
        grid=(1,),
        in_specs=[
            pl.BlockSpec((T * Bp, I), lambda i: (0, 0)),      # x (all timesteps)
            pl.BlockSpec((I, 3 * Hp), lambda i: (0, 0)),      # W_ih^T (padded)
            pl.BlockSpec((Hp, 3 * Hp), lambda i: (0, 0)),     # W_hh^T (padded)
            pl.BlockSpec((1, 3 * Hp), lambda i: (0, 0)),      # combined gate bias
            pl.BlockSpec((1, Hp), lambda i: (0, 0)),          # b_hn
            pl.BlockSpec((Hp, Cp), lambda i: (0, 0)),         # W_fc^T (padded)
            pl.BlockSpec((1, Cp), lambda i: (0, 0)),          # b_fc (padded)
        ],
        out_specs=pl.BlockSpec((Bp, Cp), lambda i: (0, 0)),
        scratch_shapes=[pltpu.VMEM((T * Bp, 3 * Hp), jnp.float32)],
        compiler_params=pltpu.CompilerParams(
            dimension_semantics=("arbitrary",)),
    )(x2d, p["w_ih"], p["w_hh"], p["b_gi"], p["b_hn"], p["w_fc"], p["b_fc"])

    return out[:B, :num_classes]


# ----------------------------------------------------------------------------
# Raw (PyTorch-layout) parameter init.
# ----------------------------------------------------------------------------
def init_params(key, vocab, input_size, hidden_size, num_classes=4):
    ks = jax.random.split(key, 8)
    s = 1.0 / jnp.sqrt(hidden_size)
    return {
        "embedding": jax.random.normal(ks[0], (vocab, input_size), jnp.float32),
        # stored pre-transposed: (in_dim, 3H), PyTorch gate order [r, z, n]
        "w_ih": jax.random.uniform(ks[1], (input_size, 3 * hidden_size),
                                   jnp.float32, -s, s),
        "w_hh": jax.random.uniform(ks[2], (hidden_size, 3 * hidden_size),
                                   jnp.float32, -s, s),
        "b_ih": jax.random.uniform(ks[3], (3 * hidden_size,), jnp.float32, -s, s),
        "b_hh": jax.random.uniform(ks[4], (3 * hidden_size,), jnp.float32, -s, s),
        "w_fc": jax.random.uniform(ks[5], (hidden_size, num_classes),
                                   jnp.float32, -s, s),
        "b_fc": jax.random.uniform(ks[6], (num_classes,), jnp.float32, -s, s),
    }


if __name__ == "__main__":
    VOCAB = 30522
    INPUT_SIZE = 32
    HIDDEN_SIZE = 32
    B, T = 2, 8

    key = jax.random.PRNGKey(0)
    pkey, tkey = jax.random.split(key)

    raw_params = init_params(pkey, VOCAB, INPUT_SIZE, HIDDEN_SIZE)
    params = prepare_params(raw_params)          # one-time padding / bf16 cast
    tokens = jax.random.randint(tkey, (B, T), 0, VOCAB, dtype=jnp.int32)

    fwd = jax.jit(gru1_forward)
    out = jax.block_until_ready(fwd(tokens, params))

    assert out.shape == (B, 4) and out.dtype == jnp.float32
    assert bool(jnp.all(jnp.isfinite(out)))
    print("KERNEL_OK")
</pallas_src>

<mosaic_0001>
module attributes {stable_mosaic.version = 11 : i64} {
  func.func @gru_fc_kernel(%arg0: i32, %arg1: memref<64x32xbf16, #tpu.memory_space<vmem>>, %arg2: memref<32x384xbf16, #tpu.memory_space<vmem>>, %arg3: memref<128x384xbf16, #tpu.memory_space<vmem>>, %arg4: memref<1x384xf32, #tpu.memory_space<vmem>>, %arg5: memref<1x128xf32, #tpu.memory_space<vmem>>, %arg6: memref<128x128xbf16, #tpu.memory_space<vmem>>, %arg7: memref<1x128xf32, #tpu.memory_space<vmem>>, %arg8: memref<8x128xf32, #tpu.memory_space<vmem>>, %arg9: memref<64x384xf32, #tpu.memory_space<vmem>>) attributes {dimension_semantics = [#tpu.dimension_semantics<arbitrary>], iteration_bounds = array<i64: 1>, scalar_prefetch = 0 : i64, scratch_operands = 1 : i64, tpu.core_type = #tpu.core_type<tc>, window_params = [{pipeline_mode = #tpu.pipeline_mode<synchronous>, transform_indices = @transform_0, window_bounds = array<i64: 64, 32>}, {pipeline_mode = #tpu.pipeline_mode<synchronous>, transform_indices = @transform_1, window_bounds = array<i64: 32, 384>}, {pipeline_mode = #tpu.pipeline_mode<synchronous>, transform_indices = @transform_2, window_bounds = array<i64: 128, 384>}, {pipeline_mode = #tpu.pipeline_mode<synchronous>, transform_indices = @transform_3, window_bounds = array<i64: 1, 384>}, {pipeline_mode = #tpu.pipeline_mode<synchronous>, transform_indices = @transform_4, window_bounds = array<i64: 1, 128>}, {pipeline_mode = #tpu.pipeline_mode<synchronous>, transform_indices = @transform_5, window_bounds = array<i64: 128, 128>}, {pipeline_mode = #tpu.pipeline_mode<synchronous>, transform_indices = @transform_6, window_bounds = array<i64: 1, 128>}, {pipeline_mode = #tpu.pipeline_mode<synchronous>, transform_indices = @transform_7, window_bounds = array<i64: 8, 128>}]} {
    %c0 = arith.constant 0 : index
    %c0_0 = arith.constant 0 : index
    %0 = vector.load %arg1[%c0, %c0_0] : memref<64x32xbf16, #tpu.memory_space<vmem>>, vector<64x32xbf16>
    %c0_1 = arith.constant 0 : index
    %c0_2 = arith.constant 0 : index
    %1 = vector.load %arg2[%c0_1, %c0_2] : memref<32x384xbf16, #tpu.memory_space<vmem>>, vector<32x384xbf16>
    %cst = arith.constant dense<0.000000e+00> : vector<64x384xf32>
    %2 = tpu.matmul %0, %1, %cst {dimension_numbers = #tpu.dot_dimension_numbers<[1], [0], [0], [1], [0, 0, 1, 1], [], []>} : vector<64x32xbf16>, vector<32x384xbf16>, vector<64x384xf32> -> vector<64x384xf32>
    %c0_3 = arith.constant 0 : index
    %c0_4 = arith.constant 0 : index
    %3 = vector.load %arg4[%c0_3, %c0_4] : memref<1x384xf32, #tpu.memory_space<vmem>>, vector<1x384xf32>
    %4 = vector.broadcast %3 : vector<1x384xf32> to vector<64x384xf32>
    %5 = arith.addf %2, %4 : vector<64x384xf32>
    %c0_5 = arith.constant 0 : index
    %c0_6 = arith.constant 0 : index
    %6 = vector.load %arg9[%c0_5, %c0_6] : memref<64x384xf32, #tpu.memory_space<vmem>>, vector<64x384xf32>
    tpu.vector_store %arg9[%c0_5, %c0_6], %5 {strides = array<i32>} : memref<64x384xf32, #tpu.memory_space<vmem>>, vector<64x384xf32>,
    %c0_7 = arith.constant 0 : index
    %c0_8 = arith.constant 0 : index
    %7 = vector.load %arg5[%c0_7, %c0_8] : memref<1x128xf32, #tpu.memory_space<vmem>>, vector<1x128xf32>
    %8 = vector.shape_cast %7 : vector<1x128xf32> to vector<1x128xf32>
    %9 = vector.broadcast %8 : vector<1x128xf32> to vector<8x128xf32>
    %cst_9 = arith.constant 0.000000e+00 : f32
    %10 = vector.broadcast %cst_9 : f32 to vector<8x128xf32>
    %c0_i32 = arith.constant 0 : i32
    %c8_i32 = arith.constant 8 : i32
    %11 = arith.muli %c0_i32, %c8_i32 : i32
    %12 = tpu.assume_multiple %11, 8 : i32
    %13 = arith.index_cast %12 : i32 to index
    %c0_10 = arith.constant 0 : index
    %14 = vector.load %arg9[%13, %c0_10] : memref<64x384xf32, #tpu.memory_space<vmem>>, vector<8x384xf32>
    %15 = arith.truncf %10 : vector<8x128xf32> to vector<8x128xbf16>
    %c0_11 = arith.constant 0 : index
    %c0_12 = arith.constant 0 : index
    %16 = vector.load %arg3[%c0_11, %c0_12] : memref<128x384xbf16, #tpu.memory_space<vmem>>, vector<128x384xbf16>
    %cst_13 = arith.constant dense<0.000000e+00> : vector<8x384xf32>
    %17 = tpu.matmul %15, %16, %cst_13 {dimension_numbers = #tpu.dot_dimension_numbers<[1], [0], [0], [1], [0, 0, 1, 1], [], []>} : vector<8x128xbf16>, vector<128x384xbf16>, vector<8x384xf32> -> vector<8x384xf32>
    %18 = vector.extract_strided_slice %14 {offsets = [0, 0], sizes = [8, 256], strides = [1, 1]} : vector<8x384xf32> to vector<8x256xf32>
    %19 = vector.extract_strided_slice %17 {offsets = [0, 0], sizes = [8, 256], strides = [1, 1]} : vector<8x384xf32> to vector<8x256xf32>
    %20 = arith.addf %18, %19 : vector<8x256xf32>
    %21 = arith.negf %20 : vector<8x256xf32>
    %22 = math.exp %21 : vector<8x256xf32>
    %cst_14 = arith.constant 1.000000e+00 : f32
    %23 = vector.broadcast %cst_14 : f32 to vector<8x256xf32>
    %24 = arith.addf %23, %22 : vector<8x256xf32>
    %25 = arith.divf %23, %24 : vector<8x256xf32>
    %26 = vector.extract_strided_slice %25 {offsets = [0, 0], sizes = [8, 128], strides = [1, 1]} : vector<8x256xf32> to vector<8x128xf32>
    %27 = vector.extract_strided_slice %25 {offsets = [0, 128], sizes = [8, 128], strides = [1, 1]} : vector<8x256xf32> to vector<8x128xf32>
    %28 = vector.extract_strided_slice %14 {offsets = [0, 256], sizes = [8, 128], strides = [1, 1]} : vector<8x384xf32> to vector<8x128xf32>
    %29 = vector.extract_strided_slice %17 {offsets = [0, 256], sizes = [8, 128], strides = [1, 1]} : vector<8x384xf32> to vector<8x128xf32>
    %30 = arith.addf %29, %9 : vector<8x128xf32>
    %31 = arith.mulf %26, %30 : vector<8x128xf32>
    %32 = arith.addf %28, %31 : vector<8x128xf32>
    %33 = math.tanh %32 : vector<8x128xf32>
    %cst_15 = arith.constant 1.000000e+00 : f32
    %34 = vector.broadcast %cst_15 : f32 to vector<8x128xf32>
    %35 = arith.subf %34, %27 : vector<8x128xf32>
    %36 = arith.mulf %35, %33 : vector<8x128xf32>
    %37 = arith.mulf %27, %10 : vector<8x128xf32>
    %38 = arith.addf %36, %37 : vector<8x128xf32>
    %c1_i32 = arith.constant 1 : i32
    %c8_i32_16 = arith.constant 8 : i32
    %39 = arith.muli %c1_i32, %c8_i32_16 : i32
    %40 = tpu.assume_multiple %39, 8 : i32
    %41 = arith.index_cast %40 : i32 to index
    %c0_17 = arith.constant 0 : index
    %42 = vector.load %arg9[%41, %c0_17] : memref<64x384xf32, #tpu.memory_space<vmem>>, vector<8x384xf32>
    %43 = arith.truncf %38 : vector<8x128xf32> to vector<8x128xbf16>
    %c0_18 = arith.constant 0 : index
    %c0_19 = arith.constant 0 : index
    %44 = vector.load %arg3[%c0_18, %c0_19] : memref<128x384xbf16, #tpu.memory_space<vmem>>, vector<128x384xbf16>
    %cst_20 = arith.constant dense<0.000000e+00> : vector<8x384xf32>
    %45 = tpu.matmul %43, %44, %cst_20 {dimension_numbers = #tpu.dot_dimension_numbers<[1], [0], [0], [1], [0, 0, 1, 1], [], []>} : vector<8x128xbf16>, vector<128x384xbf16>, vector<8x384xf32> -> vector<8x384xf32>
    %46 = vector.extract_strided_slice %42 {offsets = [0, 0], sizes = [8, 256], strides = [1, 1]} : vector<8x384xf32> to vector<8x256xf32>
    %47 = vector.extract_strided_slice %45 {offsets = [0, 0], sizes = [8, 256], strides = [1, 1]} : vector<8x384xf32> to vector<8x256xf32>
    %48 = arith.addf %46, %47 : vector<8x256xf32>
    %49 = arith.negf %48 : vector<8x256xf32>
    %50 = math.exp %49 : vector<8x256xf32>
    %cst_21 = arith.constant 1.000000e+00 : f32
    %51 = vector.broadcast %cst_21 : f32 to vector<8x256xf32>
    %52 = arith.addf %51, %50 : vector<8x256xf32>
    %53 = arith.divf %51, %52 : vector<8x256xf32>
    %54 = vector.extract_strided_slice %53 {offsets = [0, 0], sizes = [8, 128], strides = [1, 1]} : vector<8x256xf32> to vector<8x128xf32>
    %55 = vector.extract_strided_slice %53 {offsets = [0, 128], sizes = [8, 128], strides = [1, 1]} : vector<8x256xf32> to vector<8x128xf32>
    %56 = vector.extract_strided_slice %42 {offsets = [0, 256], sizes = [8, 128], strides = [1, 1]} : vector<8x384xf32> to vector<8x128xf32>
    %57 = vector.extract_strided_slice %45 {offsets = [0, 256], sizes = [8, 128], strides = [1, 1]} : vector<8x384xf32> to vector<8x128xf32>
    %58 = arith.addf %57, %9 : vector<8x128xf32>
    %59 = arith.mulf %54, %58 : vector<8x128xf32>
    %60 = arith.addf %56, %59 : vector<8x128xf32>
    %61 = math.tanh %60 : vector<8x128xf32>
    %cst_22 = arith.constant 1.000000e+00 : f32
    %62 = vector.broadcast %cst_22 : f32 to vector<8x128xf32>
    %63 = arith.subf %62, %55 : vector<8x128xf32>
    %64 = arith.mulf %63, %61 : vector<8x128xf32>
    %65 = arith.mulf %55, %38 : vector<8x128xf32>
    %66 = arith.addf %64, %65 : vector<8x128xf32>
    %c2_i32 = arith.constant 2 : i32
    %c8_i32_23 = arith.constant 8 : i32
    %67 = arith.muli %c2_i32, %c8_i32_23 : i32
    %68 = tpu.assume_multiple %67, 8 : i32
    %69 = arith.index_cast %68 : i32 to index
    %c0_24 = arith.constant 0 : index
    %70 = vector.load %arg9[%69, %c0_24] : memref<64x384xf32, #tpu.memory_space<vmem>>, vector<8x384xf32>
    %71 = arith.truncf %66 : vector<8x128xf32> to vector<8x128xbf16>
    %c0_25 = arith.constant 0 : index
    %c0_26 = arith.constant 0 : index
    %72 = vector.load %arg3[%c0_25, %c0_26] : memref<128x384xbf16, #tpu.memory_space<vmem>>, vector<128x384xbf16>
    %cst_27 = arith.constant dense<0.000000e+00> : vector<8x384xf32>
    %73 = tpu.matmul %71, %72, %cst_27 {dimension_numbers = #tpu.dot_dimension_numbers<[1], [0], [0], [1], [0, 0, 1, 1], [], []>} : vector<8x128xbf16>, vector<128x384xbf16>, vector<8x384xf32> -> vector<8x384xf32>
    %74 = vector.extract_strided_slice %70 {offsets = [0, 0], sizes = [8, 256], strides = [1, 1]} : vector<8x384xf32> to vector<8x256xf32>
    %75 = vector.extract_strided_slice %73 {offsets = [0, 0], sizes = [8, 256], strides = [1, 1]} : vector<8x384xf32> to vector<8x256xf32>
    %76 = arith.addf %74, %75 : vector<8x256xf32>
    %77 = arith.negf %76 : vector<8x256xf32>
    %78 = math.exp %77 : vector<8x256xf32>
    %cst_28 = arith.constant 1.000000e+00 : f32
    %79 = vector.broadcast %cst_28 : f32 to vector<8x256xf32>
    %80 = arith.addf %79, %78 : vector<8x256xf32>
    %81 = arith.divf %79, %80 : vector<8x256xf32>
    %82 = vector.extract_strided_slice %81 {offsets = [0, 0], sizes = [8, 128], strides = [1, 1]} : vector<8x256xf32> to vector<8x128xf32>
    %83 = vector.extract_strided_slice %81 {offsets = [0, 128], sizes = [8, 128], strides = [1, 1]} : vector<8x256xf32> to vector<8x128xf32>
    %84 = vector.extract_strided_slice %70 {offsets = [0, 256], sizes = [8, 128], strides = [1, 1]} : vector<8x384xf32> to vector<8x128xf32>
    %85 = vector.extract_strided_slice %73 {offsets = [0, 256], sizes = [8, 128], strides = [1, 1]} : vector<8x384xf32> to vector<8x128xf32>
    %86 = arith.addf %85, %9 : vector<8x128xf32>
    %87 = arith.mulf %82, %86 : vector<8x128xf32>
    %88 = arith.addf %84, %87 : vector<8x128xf32>
    %89 = math.tanh %88 : vector<8x128xf32>
    %cst_29 = arith.constant 1.000000e+00 : f32
    %90 = vector.broadcast %cst_29 : f32 to vector<8x128xf32>
    %91 = arith.subf %90, %83 : vector<8x128xf32>
    %92 = arith.mulf %91, %89 : vector<8x128xf32>
    %93 = arith.mulf %83, %66 : vector<8x128xf32>
    %94 = arith.addf %92, %93 : vector<8x128xf32>
    %c3_i32 = arith.constant 3 : i32
    %c8_i32_30 = arith.constant 8 : i32
    %95 = arith.muli %c3_i32, %c8_i32_30 : i32
    %96 = tpu.assume_multiple %95, 8 : i32
    %97 = arith.index_cast %96 : i32 to index
    %c0_31 = arith.constant 0 : index
    %98 = vector.load %arg9[%97, %c0_31] : memref<64x384xf32, #tpu.memory_space<vmem>>, vector<8x384xf32>
    %99 = arith.truncf %94 : vector<8x128xf32> to vector<8x128xbf16>
    %c0_32 = arith.constant 0 : index
    %c0_33 = arith.constant 0 : index
    %100 = vector.load %arg3[%c0_32, %c0_33] : memref<128x384xbf16, #tpu.memory_space<vmem>>, vector<128x384xbf16>
    %cst_34 = arith.constant dense<0.000000e+00> : vector<8x384xf32>
    %101 = tpu.matmul %99, %100, %cst_34 {dimension_numbers = #tpu.dot_dimension_numbers<[1], [0], [0], [1], [0, 0, 1, 1], [], []>} : vector<8x128xbf16>, vector<128x384xbf16>, vector<8x384xf32> -> vector<8x384xf32>
    %102 = vector.extract_strided_slice %98 {offsets = [0, 0], sizes = [8, 256], strides = [1, 1]} : vector<8x384xf32> to vector<8x256xf32>
    %103 = vector.extract_strided_slice %101 {offsets = [0, 0], sizes = [8, 256], strides = [1, 1]} : vector<8x384xf32> to vector<8x256xf32>
    %104 = arith.addf %102, %103 : vector<8x256xf32>
    %105 = arith.negf %104 : vector<8x256xf32>
    %106 = math.exp %105 : vector<8x256xf32>
    %cst_35 = arith.constant 1.000000e+00 : f32
    %107 = vector.broadcast %cst_35 : f32 to vector<8x256xf32>
    %108 = arith.addf %107, %106 : vector<8x256xf32>
    %109 = arith.divf %107, %108 : vector<8x256xf32>
    %110 = vector.extract_strided_slice %109 {offsets = [0, 0], sizes = [8, 128], strides = [1, 1]} : vector<8x256xf32> to vector<8x128xf32>
    %111 = vector.extract_strided_slice %109 {offsets = [0, 128], sizes = [8, 128], strides = [1, 1]} : vector<8x256xf32> to vector<8x128xf32>
    %112 = vector.extract_strided_slice %98 {offsets = [0, 256], sizes = [8, 128], strides = [1, 1]} : vector<8x384xf32> to vector<8x128xf32>
    %113 = vector.extract_strided_slice %101 {offsets = [0, 256], sizes = [8, 128], strides = [1, 1]} : vector<8x384xf32> to vector<8x128xf32>
    %114 = arith.addf %113, %9 : vector<8x128xf32>
    %115 = arith.mulf %110, %114 : vector<8x128xf32>
    %116 = arith.addf %112, %115 : vector<8x128xf32>
    %117 = math.tanh %116 : vector<8x128xf32>
    %cst_36 = arith.constant 1.000000e+00 : f32
    %118 = vector.broadcast %cst_36 : f32 to vector<8x128xf32>
    %119 = arith.subf %118, %111 : vector<8x128xf32>
    %120 = arith.mulf %119, %117 : vector<8x128xf32>
    %121 = arith.mulf %111, %94 : vector<8x128xf32>
    %122 = arith.addf %120, %121 : vector<8x128xf32>
    %c4_i32 = arith.constant 4 : i32
    %c8_i32_37 = arith.constant 8 : i32
    %123 = arith.muli %c4_i32, %c8_i32_37 : i32
    %124 = tpu.assume_multiple %123, 8 : i32
    %125 = arith.index_cast %124 : i32 to index
    %c0_38 = arith.constant 0 : index
    %126 = vector.load %arg9[%125, %c0_38] : memref<64x384xf32, #tpu.memory_space<vmem>>, vector<8x384xf32>
    %127 = arith.truncf %122 : vector<8x128xf32> to vector<8x128xbf16>
    %c0_39 = arith.constant 0 : index
    %c0_40 = arith.constant 0 : index
    %128 = vector.load %arg3[%c0_39, %c0_40] : memref<128x384xbf16, #tpu.memory_space<vmem>>, vector<128x384xbf16>
    %cst_41 = arith.constant dense<0.000000e+00> : vector<8x384xf32>
    %129 = tpu.matmul %127, %128, %cst_41 {dimension_numbers = #tpu.dot_dimension_numbers<[1], [0], [0], [1], [0, 0, 1, 1], [], []>} : vector<8x128xbf16>, vector<128x384xbf16>, vector<8x384xf32> -> vector<8x384xf32>
    %130 = vector.extract_strided_slice %126 {offsets = [0, 0], sizes = [8, 256], strides = [1, 1]} : vector<8x384xf32> to vector<8x256xf32>
    %131 = vector.extract_strided_slice %129 {offsets = [0, 0], sizes = [8, 256], strides = [1, 1]} : vector<8x384xf32> to vector<8x256xf32>
    %132 = arith.addf %130, %131 : vector<8x256xf32>
    %133 = arith.negf %132 : vector<8x256xf32>
    %134 = math.exp %133 : vector<8x256xf32>
    %cst_42 = arith.constant 1.000000e+00 : f32
    %135 = vector.broadcast %cst_42 : f32 to vector<8x256xf32>
    %136 = arith.addf %135, %134 : vector<8x256xf32>
    %137 = arith.divf %135, %136 : vector<8x256xf32>
    %138 = vector.extract_strided_slice %137 {offsets = [0, 0], sizes = [8, 128], strides = [1, 1]} : vector<8x256xf32> to vector<8x128xf32>
    %139 = vector.extract_strided_slice %137 {offsets = [0, 128], sizes = [8, 128], strides = [1, 1]} : vector<8x256xf32> to vector<8x128xf32>
    %140 = vector.extract_strided_slice %126 {offsets = [0, 256], sizes = [8, 128], strides = [1, 1]} : vector<8x384xf32> to vector<8x128xf32>
    %141 = vector.extract_strided_slice %129 {offsets = [0, 256], sizes = [8, 128], strides = [1, 1]} : vector<8x384xf32> to vector<8x128xf32>
    %142 = arith.addf %141, %9 : vector<8x128xf32>
    %143 = arith.mulf %138, %142 : vector<8x128xf32>
    %144 = arith.addf %140, %143 : vector<8x128xf32>
    %145 = math.tanh %144 : vector<8x128xf32>
    %cst_43 = arith.constant 1.000000e+00 : f32
    %146 = vector.broadcast %cst_43 : f32 to vector<8x128xf32>
    %147 = arith.subf %146, %139 : vector<8x128xf32>
    %148 = arith.mulf %147, %145 : vector<8x128xf32>
    %149 = arith.mulf %139, %122 : vector<8x128xf32>
    %150 = arith.addf %148, %149 : vector<8x128xf32>
    %c5_i32 = arith.constant 5 : i32
    %c8_i32_44 = arith.constant 8 : i32
    %151 = arith.muli %c5_i32, %c8_i32_44 : i32
    %152 = tpu.assume_multiple %151, 8 : i32
    %153 = arith.index_cast %152 : i32 to index
    %c0_45 = arith.constant 0 : index
    %154 = vector.load %arg9[%153, %c0_45] : memref<64x384xf32, #tpu.memory_space<vmem>>, vector<8x384xf32>
    %155 = arith.truncf %150 : vector<8x128xf32> to vector<8x128xbf16>
    %c0_46 = arith.constant 0 : index
    %c0_47 = arith.constant 0 : index
    %156 = vector.load %arg3[%c0_46, %c0_47] : memref<128x384xbf16, #tpu.memory_space<vmem>>, vector<128x384xbf16>
    %cst_48 = arith.constant dense<0.000000e+00> : vector<8x384xf32>
    %157 = tpu.matmul %155, %156, %cst_48 {dimension_numbers = #tpu.dot_dimension_numbers<[1], [0], [0], [1], [0, 0, 1, 1], [], []>} : vector<8x128xbf16>, vector<128x384xbf16>, vector<8x384xf32> -> vector<8x384xf32>
    %158 = vector.extract_strided_slice %154 {offsets = [0, 0], sizes = [8, 256], strides = [1, 1]} : vector<8x384xf32> to vector<8x256xf32>
    %159 = vector.extract_strided_slice %157 {offsets = [0, 0], sizes = [8, 256], strides = [1, 1]} : vector<8x384xf32> to vector<8x256xf32>
    %160 = arith.addf %158, %159 : vector<8x256xf32>
    %161 = arith.negf %160 : vector<8x256xf32>
    %162 = math.exp %161 : vector<8x256xf32>
    %cst_49 = arith.constant 1.000000e+00 : f32
    %163 = vector.broadcast %cst_49 : f32 to vector<8x256xf32>
    %164 = arith.addf %163, %162 : vector<8x256xf32>
    %165 = arith.divf %163, %164 : vector<8x256xf32>
    %166 = vector.extract_strided_slice %165 {offsets = [0, 0], sizes = [8, 128], strides = [1, 1]} : vector<8x256xf32> to vector<8x128xf32>
    %167 = vector.extract_strided_slice %165 {offsets = [0, 128], sizes = [8, 128], strides = [1, 1]} : vector<8x256xf32> to vector<8x128xf32>
    %168 = vector.extract_strided_slice %154 {offsets = [0, 256], sizes = [8, 128], strides = [1, 1]} : vector<8x384xf32> to vector<8x128xf32>
    %169 = vector.extract_strided_slice %157 {offsets = [0, 256], sizes = [8, 128], strides = [1, 1]} : vector<8x384xf32> to vector<8x128xf32>
    %170 = arith.addf %169, %9 : vector<8x128xf32>
    %171 = arith.mulf %166, %170 : vector<8x128xf32>
    %172 = arith.addf %168, %171 : vector<8x128xf32>
    %173 = math.tanh %172 : vector<8x128xf32>
    %cst_50 = arith.constant 1.000000e+00 : f32
    %174 = vector.broadcast %cst_50 : f32 to vector<8x128xf32>
    %175 = arith.subf %174, %167 : vector<8x128xf32>
    %176 = arith.mulf %175, %173 : vector<8x128xf32>
    %177 = arith.mulf %167, %150 : vector<8x128xf32>
    %178 = arith.addf %176, %177 : vector<8x128xf32>
    %c6_i32 = arith.constant 6 : i32
    %c8_i32_51 = arith.constant 8 : i32
    %179 = arith.muli %c6_i32, %c8_i32_51 : i32
    %180 = tpu.assume_multiple %179, 8 : i32
    %181 = arith.index_cast %180 : i32 to index
    %c0_52 = arith.constant 0 : index
    %182 = vector.load %arg9[%181, %c0_52] : memref<64x384xf32, #tpu.memory_space<vmem>>, vector<8x384xf32>
    %183 = arith.truncf %178 : vector<8x128xf32> to vector<8x128xbf16>
    %c0_53 = arith.constant 0 : index
    %c0_54 = arith.constant 0 : index
    %184 = vector.load %arg3[%c0_53, %c0_54] : memref<128x384xbf16, #tpu.memory_space<vmem>>, vector<128x384xbf16>
    %cst_55 = arith.constant dense<0.000000e+00> : vector<8x384xf32>
    %185 = tpu.matmul %183, %184, %cst_55 {dimension_numbers = #tpu.dot_dimension_numbers<[1], [0], [0], [1], [0, 0, 1, 1], [], []>} : vector<8x128xbf16>, vector<128x384xbf16>, vector<8x384xf32> -> vector<8x384xf32>
    %186 = vector.extract_strided_slice %182 {offsets = [0, 0], sizes = [8, 256], strides = [1, 1]} : vector<8x384xf32> to vector<8x256xf32>
    %187 = vector.extract_strided_slice %185 {offsets = [0, 0], sizes = [8, 256], strides = [1, 1]} : vector<8x384xf32> to vector<8x256xf32>
    %188 = arith.addf %186, %187 : vector<8x256xf32>
    %189 = arith.negf %188 : vector<8x256xf32>
    %190 = math.exp %189 : vector<8x256xf32>
    %cst_56 = arith.constant 1.000000e+00 : f32
    %191 = vector.broadcast %cst_56 : f32 to vector<8x256xf32>
    %192 = arith.addf %191, %190 : vector<8x256xf32>
    %193 = arith.divf %191, %192 : vector<8x256xf32>
    %194 = vector.extract_strided_slice %193 {offsets = [0, 0], sizes = [8, 128], strides = [1, 1]} : vector<8x256xf32> to vector<8x128xf32>
    %195 = vector.extract_strided_slice %193 {offsets = [0, 128], sizes = [8, 128], strides = [1, 1]} : vector<8x256xf32> to vector<8x128xf32>
    %196 = vector.extract_strided_slice %182 {offsets = [0, 256], sizes = [8, 128], strides = [1, 1]} : vector<8x384xf32> to vector<8x128xf32>
    %197 = vector.extract_strided_slice %185 {offsets = [0, 256], sizes = [8, 128], strides = [1, 1]} : vector<8x384xf32> to vector<8x128xf32>
    %198 = arith.addf %197, %9 : vector<8x128xf32>
    %199 = arith.mulf %194, %198 : vector<8x128xf32>
    %200 = arith.addf %196, %199 : vector<8x128xf32>
    %201 = math.tanh %200 : vector<8x128xf32>
    %cst_57 = arith.constant 1.000000e+00 : f32
    %202 = vector.broadcast %cst_57 : f32 to vector<8x128xf32>
    %203 = arith.subf %202, %195 : vector<8x128xf32>
    %204 = arith.mulf %203, %201 : vector<8x128xf32>
    %205 = arith.mulf %195, %178 : vector<8x128xf32>
    %206 = arith.addf %204, %205 : vector<8x128xf32>
    %c7_i32 = arith.constant 7 : i32
    %c8_i32_58 = arith.constant 8 : i32
    %207 = arith.muli %c7_i32, %c8_i32_58 : i32
    %208 = tpu.assume_multiple %207, 8 : i32
    %209 = arith.index_cast %208 : i32 to index
    %c0_59 = arith.constant 0 : index
    %210 = vector.load %arg9[%209, %c0_59] : memref<64x384xf32, #tpu.memory_space<vmem>>, vector<8x384xf32>
    %211 = arith.truncf %206 : vector<8x128xf32> to vector<8x128xbf16>
    %c0_60 = arith.constant 0 : index
    %c0_61 = arith.constant 0 : index
    %212 = vector.load %arg3[%c0_60, %c0_61] : memref<128x384xbf16, #tpu.memory_space<vmem>>, vector<128x384xbf16>
    %cst_62 = arith.constant dense<0.000000e+00> : vector<8x384xf32>
    %213 = tpu.matmul %211, %212, %cst_62 {dimension_numbers = #tpu.dot_dimension_numbers<[1], [0], [0], [1], [0, 0, 1, 1], [], []>} : vector<8x128xbf16>, vector<128x384xbf16>, vector<8x384xf32> -> vector<8x384xf32>
    %214 = vector.extract_strided_slice %210 {offsets = [0, 0], sizes = [8, 256], strides = [1, 1]} : vector<8x384xf32> to vector<8x256xf32>
    %215 = vector.extract_strided_slice %213 {offsets = [0, 0], sizes = [8, 256], strides = [1, 1]} : vector<8x384xf32> to vector<8x256xf32>
    %216 = arith.addf %214, %215 : vector<8x256xf32>
    %217 = arith.negf %216 : vector<8x256xf32>
    %218 = math.exp %217 : vector<8x256xf32>
    %cst_63 = arith.constant 1.000000e+00 : f32
    %219 = vector.broadcast %cst_63 : f32 to vector<8x256xf32>
    %220 = arith.addf %219, %218 : vector<8x256xf32>
    %221 = arith.divf %219, %220 : vector<8x256xf32>
    %222 = vector.extract_strided_slice %221 {offsets = [0, 0], sizes = [8, 128], strides = [1, 1]} : vector<8x256xf32> to vector<8x128xf32>
    %223 = vector.extract_strided_slice %221 {offsets = [0, 128], sizes = [8, 128], strides = [1, 1]} : vector<8x256xf32> to vector<8x128xf32>
    %224 = vector.extract_strided_slice %210 {offsets = [0, 256], sizes = [8, 128], strides = [1, 1]} : vector<8x384xf32> to vector<8x128xf32>
    %225 = vector.extract_strided_slice %213 {offsets = [0, 256], sizes = [8, 128], strides = [1, 1]} : vector<8x384xf32> to vector<8x128xf32>
    %226 = arith.addf %225, %9 : vector<8x128xf32>
    %227 = arith.mulf %222, %226 : vector<8x128xf32>
    %228 = arith.addf %224, %227 : vector<8x128xf32>
    %229 = math.tanh %228 : vector<8x128xf32>
    %cst_64 = arith.constant 1.000000e+00 : f32
    %230 = vector.broadcast %cst_64 : f32 to vector<8x128xf32>
    %231 = arith.subf %230, %223 : vector<8x128xf32>
    %232 = arith.mulf %231, %229 : vector<8x128xf32>
    %233 = arith.mulf %223, %206 : vector<8x128xf32>
    %234 = arith.addf %232, %233 : vector<8x128xf32>
    %c8_i32_65 = arith.constant 8 : i32
    %235 = arith.truncf %234 : vector<8x128xf32> to vector<8x128xbf16>
    %c0_66 = arith.constant 0 : index
    %c0_67 = arith.constant 0 : index
    %236 = vector.load %arg6[%c0_66, %c0_67] : memref<128x128xbf16, #tpu.memory_space<vmem>>, vector<128x128xbf16>
    %cst_68 = arith.constant dense<0.000000e+00> : vector<8x128xf32>
    %237 = tpu.matmul %235, %236, %cst_68 {dimension_numbers = #tpu.dot_dimension_numbers<[1], [0], [0], [1], [0, 0, 1, 1], [], []>} : vector<8x128xbf16>, vector<128x128xbf16>, vector<8x128xf32> -> vector<8x128xf32>
    %c0_69 = arith.constant 0 : index
    %c0_70 = arith.constant 0 : index
    %238 = vector.load %arg7[%c0_69, %c0_70] : memref<1x128xf32, #tpu.memory_space<vmem>>, vector<1x128xf32>
    %239 = vector.broadcast %238 : vector<1x128xf32> to vector<8x128xf32>
    %240 = arith.addf %237, %239 : vector<8x128xf32>
    %c0_71 = arith.constant 0 : index
    %c0_72 = arith.constant 0 : index
    %241 = vector.load %arg8[%c0_71, %c0_72] : memref<8x128xf32, #tpu.memory_space<vmem>>, vector<8x128xf32>
    tpu.vector_store %arg8[%c0_71, %c0_72], %240 {strides = array<i32>} : memref<8x128xf32, #tpu.memory_space<vmem>>, vector<8x128xf32>,
    return
  }
  func.func @transform_0(%arg0: i32) -> (i32, i32) {
    %c0_i32 = arith.constant 0 : i32
    %c0_i32_0 = arith.constant 0 : i32
    %c0_i32_1 = arith.constant 0 : i32
    return %c0_i32, %c0_i32_0 : i32, i32
  }
  func.func @transform_1(%arg0: i32) -> (i32, i32) {
    %c0_i32 = arith.constant 0 : i32
    %c0_i32_0 = arith.constant 0 : i32
    %c0_i32_1 = arith.constant 0 : i32
    return %c0_i32, %c0_i32_0 : i32, i32
  }
  func.func @transform_2(%arg0: i32) -> (i32, i32) {
    %c0_i32 = arith.constant 0 : i32
    %c0_i32_0 = arith.constant 0 : i32
    %c0_i32_1 = arith.constant 0 : i32
    return %c0_i32, %c0_i32_0 : i32, i32
  }
  func.func @transform_3(%arg0: i32) -> (i32, i32) {
    %c0_i32 = arith.constant 0 : i32
    %c0_i32_0 = arith.constant 0 : i32
    %c0_i32_1 = arith.constant 0 : i32
    return %c0_i32, %c0_i32_0 : i32, i32
  }
  func.func @transform_4(%arg0: i32) -> (i32, i32) {
    %c0_i32 = arith.constant 0 : i32
    %c0_i32_0 = arith.constant 0 : i32
    %c0_i32_1 = arith.constant 0 : i32
    return %c0_i32, %c0_i32_0 : i32, i32
  }
  func.func @transform_5(%arg0: i32) -> (i32, i32) {
    %c0_i32 = arith.constant 0 : i32
    %c0_i32_0 = arith.constant 0 : i32
    %c0_i32_1 = arith.constant 0 : i32
    return %c0_i32, %c0_i32_0 : i32, i32
  }
  func.func @transform_6(%arg0: i32) -> (i32, i32) {
    %c0_i32 = arith.constant 0 : i32
    %c0_i32_0 = arith.constant 0 : i32
    %c0_i32_1 = arith.constant 0 : i32
    return %c0_i32, %c0_i32_0 : i32, i32
  }
  func.func @transform_7(%arg0: i32) -> (i32, i32) {
    %c0_i32 = arith.constant 0 : i32
    %c0_i32_0 = arith.constant 0 : i32
    %c0_i32_1 = arith.constant 0 : i32
    return %c0_i32, %c0_i32_0 : i32, i32
  }
}

</mosaic_0001>

<llo_original>
// kernel: gru1_forward.1
$region0: #{gru1_forward.1}
  #allocation0 [shape = 'u32[]', space=smem, size = 0x4, offset = 0x4, fixed_abs, tag = 'smem constant byte address 0x4 - core index']
  #allocation1 [shape = 'u32[144,128]{1,0:T(1,128)}', space=vmem, size = 0x12000, scoped, tag = 'internal scratch']
  #allocation2 [shape = 'f32[64,384]{1,0:T(8,128)}', space=vmem, size = 0x18000, scoped, tag = 'scratch operand']
  %s0 = inlined_call_operand.vmem [shape: bf16[64,32], index: 0, kind: input, shape index: {}]
  %s1 = inlined_call_operand.vmem [shape: bf16[32,384], index: 1, kind: input, shape index: {}]
  %s2 = inlined_call_operand.vmem [shape: bf16[128,384], index: 2, kind: input, shape index: {}]
  %s3 = inlined_call_operand.vmem [shape: f32[1,384], index: 3, kind: input, shape index: {}]
  %s4 = inlined_call_operand.vmem [shape: f32[1,128], index: 4, kind: input, shape index: {}]
  %s5 = inlined_call_operand.vmem [shape: bf16[128,128], index: 5, kind: input, shape index: {}]
  %s6 = inlined_call_operand.vmem [shape: f32[1,128], index: 6, kind: input, shape index: {}]
  %s7 = inlined_call_operand.vmem [shape: f32[8,128], index: 7, kind: output, shape index: {}]
  %s8 = sld [smem:[#allocation0]]
  $region38: #{gru1_forward.1} parent=0
    _
  %s10 = ssub.s32 1, %s8
  %s11 = scalar_select 0, %s10, %s8
  // Predicated region
  $region2: #{gru1_forward.1} parent=0 // pred_check
    _
  $region3: #{gru1_forward.1} parent=0 // pred_check_branch
    %13 = sbr.rel (0) target = $region5
  $region4: #{gru1_forward.1} parent=0 // pred_region
    _
  $region5: #{gru1_forward.1} parent=0 // pred_fallthru
    _
  // Predicated region
  $region6: #{gru1_forward.1} parent=0 // pred_check
    _
  $region7: #{gru1_forward.1} parent=0 // pred_check_branch
    %15 = sbr.rel (0) target = $region9
  $region8: #{gru1_forward.1} parent=0 // pred_region
    _
  $region9: #{gru1_forward.1} parent=0 // pred_fallthru
    _
  // Predicated region
  $region10: #{gru1_forward.1} parent=0 // pred_check
    _
  $region11: #{gru1_forward.1} parent=0 // pred_check_branch
    %17 = sbr.rel (0) target = $region13
  $region12: #{gru1_forward.1} parent=0 // pred_region
    _
  $region13: #{gru1_forward.1} parent=0 // pred_fallthru
    _
  // Predicated region
  $region14: #{gru1_forward.1} parent=0 // pred_check
    _
  $region15: #{gru1_forward.1} parent=0 // pred_check_branch
    %19 = sbr.rel (0) target = $region17
  $region16: #{gru1_forward.1} parent=0 // pred_region
    _
  $region17: #{gru1_forward.1} parent=0 // pred_fallthru
    _
  // Predicated region
  $region18: #{gru1_forward.1} parent=0 // pred_check
    _
  $region19: #{gru1_forward.1} parent=0 // pred_check_branch
    %21 = sbr.rel (0) target = $region21
  $region20: #{gru1_forward.1} parent=0 // pred_region
    _
  $region21: #{gru1_forward.1} parent=0 // pred_fallthru
    _
  // Predicated region
  $region22: #{gru1_forward.1} parent=0 // pred_check
    _
  $region23: #{gru1_forward.1} parent=0 // pred_check_branch
    %23 = sbr.rel (0) target = $region25
  $region24: #{gru1_forward.1} parent=0 // pred_region
    _
  $region25: #{gru1_forward.1} parent=0 // pred_fallthru
    _
  // Predicated region
  $region26: #{gru1_forward.1} parent=0 // pred_check
    _
  $region27: #{gru1_forward.1} parent=0 // pred_check_branch
    %25 = sbr.rel (0) target = $region29
  $region28: #{gru1_forward.1} parent=0 // pred_region
    _
  $region29: #{gru1_forward.1} parent=0 // pred_fallthru
    _
  %v27 = vld [vmem:[%s0] sm:$0xf]
  %v28 = vld [vmem:[%s0 + $0x4] sm:$0xf]
  %v29 = vld [vmem:[%s0 + $0x8] sm:$0xf]
  %v30 = vld [vmem:[%s0 + $0xc] sm:$0xf]
  %v31 = vld [vmem:[%s0 + $0x10] sm:$0xf]
  %v32 = vld [vmem:[%s0 + $0x14] sm:$0xf]
  %v33 = vld [vmem:[%s0 + $0x18] sm:$0xf]
  %v34 = vld [vmem:[%s0 + $0x1c] sm:$0xf]
  %v35 = vld [vmem:[%s1] sm:$0xff]
  %v36 = vld [vmem:[%s1 + $0x8] sm:$0xf]
  %v37 = vld [vmem:[%s1 + $0xc] sm:$0xff]
  %v38 = vld [vmem:[%s1 + $0x14] sm:$0xf]
  %v39 = vld [vmem:[%s1 + $0x18] sm:$0xff]
  %v40 = vld [vmem:[%s1 + $0x20] sm:$0xf]
  %v41 = vld [vmem:[%s1 + $0x24] sm:$0xff]
  %v42 = vld [vmem:[%s1 + $0x2c] sm:$0xf]
  %v43 = vld [vmem:[%s3] sm:$0x7]
  %v45 = vlaneseq
  %v46 = vshrl.u32 %v45, 7
  %v47 = vsub.s32 0, %v46
  %v48 = vrot.slane %v43, %v47
  %v49 = vlaneseq
  %v50 = vshrl.u32 %v49, 7
  %v51 = vsub.s32 1, %v50
  %v52 = vrot.slane %v43, %v51
  %v53 = vlaneseq
  %v54 = vshrl.u32 %v53, 7
  %v55 = vsub.s32 2, %v54
  %v56 = vrot.slane %v43, %v55
  %v68 = vunpack.c.l.b16 %v27
  %v69 = vunpack.c.l.b16 %v28
  %v70 = vunpack.c.l.b16 %v29
  %v71 = vunpack.c.l.b16 %v30
  %v72 = vunpack.c.l.b16 %v31
  %v73 = vunpack.c.l.b16 %v32
  %v74 = vunpack.c.l.b16 %v33
  %v75 = vunpack.c.l.b16 %v34
  %v76 = vpack.c.b16 %v69, %v68
  %v77 = vpack.c.b16 %v71, %v70
  %v78 = vpack.c.b16 %v73, %v72
  %v79 = vpack.c.b16 %v75, %v74
  %v88 = vunpack.c.l.b16 %v35
  %v89 = vunpack.c.h.b16 %v35
  %v90 = vunpack.c.l.b16 %v36
  %v91 = vunpack.c.l.b16 %v37
  %v92 = vunpack.c.h.b16 %v37
  %v93 = vunpack.c.l.b16 %v38
  %v94 = vunpack.c.l.b16 %v39
  %v95 = vunpack.c.h.b16 %v39
  %v96 = vunpack.c.l.b16 %v40
  %v97 = vunpack.c.l.b16 %v41
  %v98 = vunpack.c.h.b16 %v41
  %v99 = vunpack.c.l.b16 %v42
  %v100 = vpack.c.b16 %v91, %v88
  %v101 = vpack.c.b16 %v92, %v89
  %v102 = vpack.c.b16 %v93, %v90
  %v103 = vpack.c.b16 %v97, %v94
  %v104 = vpack.c.b16 %v98, %v95
  %v105 = vpack.c.b16 %v99, %v96
  %vm112 = vcmask 261120
  %v114 = vsel %vm112, %v76, 0
  %v117 = vsel %vm112, %v77, 0
  %v120 = vsel %vm112, %v78, 0
  %v123 = vsel %vm112, %v79, 0
  %125 = vmatprep.subr.bf16.mxu0 0
  %126 = vmatpush1.bf16.msra.mxu0 0
  %127 = vmatprep.subr.bf16.mxu0 0
  %128 = vmatpush1.bf16.msra.mxu0 0
  %129 = vmatprep.subr.bf16.mxu0 0
  %130 = vmatpush1.bf16.msra.mxu0 0
  %131 = vmatprep.subr.bf16.mxu0 0
  %132 = vmatpush1.bf16.msra.mxu0 0
  %133 = vmatprep.subr.bf16.mxu0 0
  %134 = vmatpush1.bf16.msra.mxu0 0
  %135 = vmatprep.subr.bf16.mxu0 0
  %136 = vmatpush1.bf16.msra.mxu0 0
  %137 = vmatprep.subr.bf16.mxu0 %v104
  %138 = vmatpush1.bf16.msra.mxu0 %v103
  %139 = vmatprep.subr.bf16.mxu0 %v101
  %140 = vmatpush1.bf16.msra.mxu0 %v100
  %141 = vmatprep.subr.bf16.mxu0 0
  %142 = vmatpush2.bf16.msra.mxu0 0
  %143 = vmatprep.subr.bf16.mxu0 0
  %144 = vmatpush2.bf16.msra.mxu0 0
  %145 = vmatprep.subr.bf16.mxu0 0
  %146 = vmatpush2.bf16.msra.mxu0 0
  %147 = vmatprep.subr.bf16.mxu0 0
  %148 = vmatpush2.bf16.msra.mxu0 0
  %149 = vmatprep.subr.bf16.mxu0 0
  %150 = vmatpush2.bf16.msra.mxu0 0
  %151 = vmatprep.subr.bf16.mxu0 0
  %152 = vmatpush2.bf16.msra.mxu0 0
  %153 = vmatprep.subr.bf16.mxu0 0
  %154 = vmatpush2.bf16.msra.mxu0 0
  %155 = vmatprep.subr.bf16.mxu0 0
  %156 = vmatpush2.bf16.msra.mxu0 0
  %157 = vmatprep.mubr.bf16.mxu0 0
  %158 = vmatmul.mubr.bf16.gmra.mxu0 %v114
  %v159 = vpop.f32.mrf.mxu0
  %v160 = vadd.f32 %v48, %v159
  %v161 = vpop.f32.mrf.mxu0
  %v162 = vadd.f32 %v52, %v161
  %v163 = vpop.f32.mrf.mxu0
  %v164 = vadd.f32 %v48, %v163
  %v165 = vpop.f32.mrf.mxu0
  %v166 = vadd.f32 %v52, %v165
  %167 = vmatprep.mubr.bf16.mxu0 0
  %168 = vmatmul.mubr.bf16.gmra.mxu0 %v117
  %v169 = vpop.f32.mrf.mxu0
  %v170 = vadd.f32 %v48, %v169
  %v171 = vpop.f32.mrf.mxu0
  %v172 = vadd.f32 %v52, %v171
  %v173 = vpop.f32.mrf.mxu0
  %v174 = vadd.f32 %v48, %v173
  %v175 = vpop.f32.mrf.mxu0
  %v176 = vadd.f32 %v52, %v175
  %177 = vmatprep.mubr.bf16.mxu0 0
  %178 = vmatmul.mubr.bf16.gmra.mxu0 %v120
  %v179 = vpop.f32.mrf.mxu0
  %v180 = vadd.f32 %v48, %v179
  %v181 = vpop.f32.mrf.mxu0
  %v182 = vadd.f32 %v52, %v181
  %v183 = vpop.f32.mrf.mxu0
  %v184 = vadd.f32 %v48, %v183
  %v185 = vpop.f32.mrf.mxu0
  %v186 = vadd.f32 %v52, %v185
  %187 = vmatprep.mubr.bf16.mxu0 0
  %188 = vmatmul.mubr.bf16.gmra.mxu0 %v123
  %v189 = vpop.f32.mrf.mxu0
  %v190 = vadd.f32 %v48, %v189
  %v191 = vpop.f32.mrf.mxu0
  %v192 = vadd.f32 %v52, %v191
  %v193 = vpop.f32.mrf.mxu0
  %v194 = vadd.f32 %v48, %v193
  %v195 = vpop.f32.mrf.mxu0
  %v196 = vadd.f32 %v52, %v195
  %197 = vdwg.mxu0
  %198 = vmatprep.subr.bf16.mxu0 0
  %199 = vmatpush1.bf16.msra.mxu0 0
  %200 = vmatprep.subr.bf16.mxu0 0
  %201 = vmatpush1.bf16.msra.mxu0 0
  %202 = vmatprep.subr.bf16.mxu0 0
  %203 = vmatpush1.bf16.msra.mxu0 0
  %204 = vmatprep.subr.bf16.mxu0 0
  %205 = vmatpush1.bf16.msra.mxu0 0
  %206 = vmatprep.subr.bf16.mxu0 0
  %207 = vmatpush1.bf16.msra.mxu0 0
  %208 = vmatprep.subr.bf16.mxu0 0
  %209 = vmatpush1.bf16.msra.mxu0 0
  %210 = vmatprep.subr.bf16.mxu0 0
  %211 = vmatpush1.bf16.msra.mxu0 %v105
  %212 = vmatprep.subr.bf16.mxu0 0
  %213 = vmatpush1.bf16.msra.mxu0 %v102
  %214 = vmatprep.subr.bf16.mxu0 0
  %215 = vmatpush2.bf16.msra.mxu0 0
  %216 = vmatprep.subr.bf16.mxu0 0
  %217 = vmatpush2.bf16.msra.mxu0 0
  %218 = vmatprep.subr.bf16.mxu0 0
  %219 = vmatpush2.bf16.msra.mxu0 0
  %220 = vmatprep.subr.bf16.mxu0 0
  %221 = vmatpush2.bf16.msra.mxu0 0
  %222 = vmatprep.subr.bf16.mxu0 0
  %223 = vmatpush2.bf16.msra.mxu0 0
  %224 = vmatprep.subr.bf16.mxu0 0
  %225 = vmatpush2.bf16.msra.mxu0 0
  %226 = vmatprep.subr.bf16.mxu0 0
  %227 = vmatpush2.bf16.msra.mxu0 0
  %228 = vmatprep.subr.bf16.mxu0 0
  %229 = vmatpush2.bf16.msra.mxu0 0
  %230 = vmatprep.mubr.bf16.mxu0 0
  %231 = vmatmul.mubr.bf16.gmra.mxu0 %v114
  %v232 = vpop.f32.mrf.mxu0
  %v233 = vadd.f32 %v56, %v232
  %v234 = vpop.f32.mrf.mxu0
  %v235 = vpop.f32.mrf.mxu0
  %v236 = vadd.f32 %v56, %v235
  %v237 = vpop.f32.mrf.mxu0
  %238 = vmatprep.mubr.bf16.mxu0 0
  %239 = vmatmul.mubr.bf16.gmra.mxu0 %v117
  %v240 = vpop.f32.mrf.mxu0
  %v241 = vadd.f32 %v56, %v240
  %v242 = vpop.f32.mrf.mxu0
  %v243 = vpop.f32.mrf.mxu0
  %v244 = vadd.f32 %v56, %v243
  %v245 = vpop.f32.mrf.mxu0
  %246 = vmatprep.mubr.bf16.mxu0 0
  %247 = vmatmul.mubr.bf16.gmra.mxu0 %v120
  %v248 = vpop.f32.mrf.mxu0
  %v249 = vadd.f32 %v56, %v248
  %v250 = vpop.f32.mrf.mxu0
  %v251 = vpop.f32.mrf.mxu0
  %v252 = vadd.f32 %v56, %v251
  %v253 = vpop.f32.mrf.mxu0
  %254 = vmatprep.mubr.bf16.mxu0 0
  %255 = vmatmul.mubr.bf16.gmra.mxu0 %v123
  %v256 = vpop.f32.mrf.mxu0
  %v257 = vadd.f32 %v56, %v256
  %v258 = vpop.f32.mrf.mxu0
  %v259 = vpop.f32.mrf.mxu0
  %v260 = vadd.f32 %v56, %v259
  %v261 = vpop.f32.mrf.mxu0
  %262 = vdwg.mxu0
  %263 = vst [vmem:[#allocation2] sm:$0xff] %v160
  %264 = vst [vmem:[#allocation2 + $0x8] sm:$0xff] %v162
  %265 = vst [vmem:[#allocation2 + $0x10] sm:$0xff] %v233
  %266 = vst [vmem:[#allocation2 + $0x18] sm:$0xff] %v164
  %267 = vst [vmem:[#allocation2 + $0x20] sm:$0xff] %v166
  %268 = vst [vmem:[#allocation2 + $0x28] sm:$0xff] %v236
  %269 = vst [vmem:[#allocation2 + $0x30] sm:$0xff] %v170
  %270 = vst [vmem:[#allocation2 + $0x38] sm:$0xff] %v172
  %271 = vst [vmem:[#allocation2 + $0x40] sm:$0xff] %v241
  %272 = vst [vmem:[#allocation2 + $0x48] sm:$0xff] %v174
  %273 = vst [vmem:[#allocation2 + $0x50] sm:$0xff] %v176
  %274 = vst [vmem:[#allocation2 + $0x58] sm:$0xff] %v244
  %275 = vst [vmem:[#allocation2 + $0x60] sm:$0xff] %v180
  %276 = vst [vmem:[#allocation2 + $0x68] sm:$0xff] %v182
  %277 = vst [vmem:[#allocation2 + $0x70] sm:$0xff] %v249
  %278 = vst [vmem:[#allocation2 + $0x78] sm:$0xff] %v184
  %279 = vst [vmem:[#allocation2 + $0x80] sm:$0xff] %v186
  %280 = vst [vmem:[#allocation2 + $0x88] sm:$0xff] %v252
  %281 = vst [vmem:[#allocation2 + $0x90] sm:$0xff] %v190
  %282 = vst [vmem:[#allocation2 + $0x98] sm:$0xff] %v192
  %283 = vst [vmem:[#allocation2 + $0xa0] sm:$0xff] %v257
  %284 = vst [vmem:[#allocation2 + $0xa8] sm:$0xff] %v194
  %285 = vst [vmem:[#allocation2 + $0xb0] sm:$0xff] %v196
  %286 = vst [vmem:[#allocation2 + $0xb8] sm:$0xff] %v260
  %v287 = vld [vmem:[%s4] sm:$0x1]
  %v289 = vlaneseq
  %v290 = vshrl.u32 %v289, 7
  %v291 = vsub.s32 0, %v290
  %v292 = vrot.slane %v287, %v291
  %s294 = smul.u32 0, 3
  %s295 = smul.addr %s294, 8
  %s296 = scalar_lea.vmem [#allocation2], %s295
  %v297 = vld [vmem:[%s296] sm:$0xff]
  %v298 = vld [vmem:[%s296 + $0x8] sm:$0xff]
  %v299 = vld [vmem:[%s296 + $0x10] sm:$0xff]
  %v300 = vld [vmem:[%s2] sm:$0xff]
  %v301 = vld [vmem:[%s2 + $0x8] sm:$0xf]
  %v302 = vld [vmem:[%s2 + $0xc] sm:$0xff]
  %v303 = vld [vmem:[%s2 + $0x14] sm:$0xf]
  %v304 = vld [vmem:[%s2 + $0x18] sm:$0xff]
  %v305 = vld [vmem:[%s2 + $0x20] sm:$0xf]
  %v306 = vld [vmem:[%s2 + $0x24] sm:$0xff]
  %v307 = vld [vmem:[%s2 + $0x2c] sm:$0xf]
  %v308 = vld [vmem:[%s2 + $0x30] sm:$0xff]
  %v309 = vld [vmem:[%s2 + $0x38] sm:$0xf]
  %v310 = vld [vmem:[%s2 + $0x3c] sm:$0xff]
  %v311 = vld [vmem:[%s2 + $0x44] sm:$0xf]
  %v312 = vld [vmem:[%s2 + $0x48] sm:$0xff]
  %v313 = vld [vmem:[%s2 + $0x50] sm:$0xf]
  %v314 = vld [vmem:[%s2 + $0x54] sm:$0xff]
  %v315 = vld [vmem:[%s2 + $0x5c] sm:$0xf]
  %v316 = vld [vmem:[%s2 + $0x60] sm:$0xff]
  %v317 = vld [vmem:[%s2 + $0x68] sm:$0xf]
  %v318 = vld [vmem:[%s2 + $0x6c] sm:$0xff]
  %v319 = vld [vmem:[%s2 + $0x74] sm:$0xf]
  %v320 = vld [vmem:[%s2 + $0x78] sm:$0xff]
  %v321 = vld [vmem:[%s2 + $0x80] sm:$0xf]
  %v322 = vld [vmem:[%s2 + $0x84] sm:$0xff]
  %v323 = vld [vmem:[%s2 + $0x8c] sm:$0xf]
  %v324 = vld [vmem:[%s2 + $0x90] sm:$0xff]
  %v325 = vld [vmem:[%s2 + $0x98] sm:$0xf]
  %v326 = vld [vmem:[%s2 + $0x9c] sm:$0xff]
  %v327 = vld [vmem:[%s2 + $0xa4] sm:$0xf]
  %v328 = vld [vmem:[%s2 + $0xa8] sm:$0xff]
  %v329 = vld [vmem:[%s2 + $0xb0] sm:$0xf]
  %v330 = vld [vmem:[%s2 + $0xb4] sm:$0xff]
  %v331 = vld [vmem:[%s2 + $0xbc] sm:$0xf]
  %v364 = vunpack.c.l.b16 %v300
  %v365 = vunpack.c.h.b16 %v300
  %v366 = vunpack.c.l.b16 %v301
  %v367 = vunpack.c.l.b16 %v302
  %v368 = vunpack.c.h.b16 %v302
  %v369 = vunpack.c.l.b16 %v303
  %v370 = vunpack.c.l.b16 %v304
  %v371 = vunpack.c.h.b16 %v304
  %v372 = vunpack.c.l.b16 %v305
  %v373 = vunpack.c.l.b16 %v306
  %v374 = vunpack.c.h.b16 %v306
  %v375 = vunpack.c.l.b16 %v307
  %v376 = vunpack.c.l.b16 %v308
  %v377 = vunpack.c.h.b16 %v308
  %v378 = vunpack.c.l.b16 %v309
  %v379 = vunpack.c.l.b16 %v310
  %v380 = vunpack.c.h.b16 %v310
  %v381 = vunpack.c.l.b16 %v311
  %v382 = vunpack.c.l.b16 %v312
  %v383 = vunpack.c.h.b16 %v312
  %v384 = vunpack.c.l.b16 %v313
  %v385 = vunpack.c.l.b16 %v314
  %v386 = vunpack.c.h.b16 %v314
  %v387 = vunpack.c.l.b16 %v315
  %v388 = vunpack.c.l.b16 %v316
  %v389 = vunpack.c.h.b16 %v316
  %v390 = vunpack.c.l.b16 %v317
  %v391 = vunpack.c.l.b16 %v318
  %v392 = vunpack.c.h.b16 %v318
  %v393 = vunpack.c.l.b16 %v319
  %v394 = vunpack.c.l.b16 %v320
  %v395 = vunpack.c.h.b16 %v320
  %v396 = vunpack.c.l.b16 %v321
  %v397 = vunpack.c.l.b16 %v322
  %v398 = vunpack.c.h.b16 %v322
  %v399 = vunpack.c.l.b16 %v323
  %v400 = vunpack.c.l.b16 %v324
  %v401 = vunpack.c.h.b16 %v324
  %v402 = vunpack.c.l.b16 %v325
  %v403 = vunpack.c.l.b16 %v326
  %v404 = vunpack.c.h.b16 %v326
  %v405 = vunpack.c.l.b16 %v327
  %v406 = vunpack.c.l.b16 %v328
  %v407 = vunpack.c.h.b16 %v328
  %v408 = vunpack.c.l.b16 %v329
  %v409 = vunpack.c.l.b16 %v330
  %v410 = vunpack.c.h.b16 %v330
  %v411 = vunpack.c.l.b16 %v331
  %v412 = vpack.c.b16 %v367, %v364
  %v413 = vpack.c.b16 %v368, %v365
  %v414 = vpack.c.b16 %v369, %v366
  %v415 = vpack.c.b16 %v373, %v370
  %v416 = vpack.c.b16 %v374, %v371
  %v417 = vpack.c.b16 %v375, %v372
  %v418 = vpack.c.b16 %v379, %v376
  %v419 = vpack.c.b16 %v380, %v377
  %v420 = vpack.c.b16 %v381, %v378
  %v421 = vpack.c.b16 %v385, %v382
  %v422 = vpack.c.b16 %v386, %v383
  %v423 = vpack.c.b16 %v387, %v384
  %v424 = vpack.c.b16 %v391, %v388
  %v425 = vpack.c.b16 %v392, %v389
  %v426 = vpack.c.b16 %v393, %v390
  %v427 = vpack.c.b16 %v397, %v394
  %v428 = vpack.c.b16 %v398, %v395
  %v429 = vpack.c.b16 %v399, %v396
  %v430 = vpack.c.b16 %v403, %v400
  %v431 = vpack.c.b16 %v404, %v401
  %v432 = vpack.c.b16 %v405, %v402
  %v433 = vpack.c.b16 %v409, %v406
  %v434 = vpack.c.b16 %v410, %v407
  %v435 = vpack.c.b16 %v411, %v408
  %460 = vmatprep.subr.bf16.mxu0 %v434
  %461 = vmatpush1.bf16.msra.mxu0 %v433
  %462 = vmatprep.subr.bf16.mxu0 %v431
  %463 = vmatpush1.bf16.msra.mxu0 %v430
  %464 = vmatprep.subr.bf16.mxu0 %v428
  %465 = vmatpush1.bf16.msra.mxu0 %v427
  %466 = vmatprep.subr.bf16.mxu0 %v425
  %467 = vmatpush1.bf16.msra.mxu0 %v424
  %468 = vmatprep.subr.bf16.mxu0 %v422
  %469 = vmatpush1.bf16.msra.mxu0 %v421
  %470 = vmatprep.subr.bf16.mxu0 %v419
  %471 = vmatpush1.bf16.msra.mxu0 %v418
  %472 = vmatprep.subr.bf16.mxu0 %v416
  %473 = vmatpush1.bf16.msra.mxu0 %v415
  %474 = vmatprep.subr.bf16.mxu0 %v413
  %475 = vmatpush1.bf16.msra.mxu0 %v412
  %476 = vmatprep.subr.bf16.mxu0 0
  %477 = vmatpush2.bf16.msra.mxu0 0
  %478 = vmatprep.subr.bf16.mxu0 0
  %479 = vmatpush2.bf16.msra.mxu0 0
  %480 = vmatprep.subr.bf16.mxu0 0
  %481 = vmatpush2.bf16.msra.mxu0 0
  %482 = vmatprep.subr.bf16.mxu0 0
  %483 = vmatpush2.bf16.msra.mxu0 0
  %484 = vmatprep.subr.bf16.mxu0 0
  %485 = vmatpush2.bf16.msra.mxu0 0
  %486 = vmatprep.subr.bf16.mxu0 0
  %487 = vmatpush2.bf16.msra.mxu0 0
  %488 = vmatprep.subr.bf16.mxu0 0
  %489 = vmatpush2.bf16.msra.mxu0 0
  %490 = vmatprep.subr.bf16.mxu0 0
  %491 = vmatpush2.bf16.msra.mxu0 0
  %492 = vmatprep.mubr.bf16.mxu0 0
  %493 = vmatmul.mubr.bf16.gmra.mxu0 0
  %v494 = vpop.f32.mrf.mxu0
  %v495 = vadd.f32 0.0, %v494
  %v496 = vpop.f32.mrf.mxu0
  %v497 = vadd.f32 0.0, %v496
  %v498 = vpop.f32.mrf.mxu0
  %v499 = vpop.f32.mrf.mxu0
  %500 = vdwg.mxu0
  %501 = vmatprep.subr.bf16.mxu0 0
  %502 = vmatpush1.bf16.msra.mxu0 %v435
  %503 = vmatprep.subr.bf16.mxu0 0
  %504 = vmatpush1.bf16.msra.mxu0 %v432
  %505 = vmatprep.subr.bf16.mxu0 0
  %506 = vmatpush1.bf16.msra.mxu0 %v429
  %507 = vmatprep.subr.bf16.mxu0 0
  %508 = vmatpush1.bf16.msra.mxu0 %v426
  %509 = vmatprep.subr.bf16.mxu0 0
  %510 = vmatpush1.bf16.msra.mxu0 %v423
  %511 = vmatprep.subr.bf16.mxu0 0
  %512 = vmatpush1.bf16.msra.mxu0 %v420
  %513 = vmatprep.subr.bf16.mxu0 0
  %514 = vmatpush1.bf16.msra.mxu0 %v417
  %515 = vmatprep.subr.bf16.mxu0 0
  %516 = vmatpush1.bf16.msra.mxu0 %v414
  %517 = vmatprep.subr.bf16.mxu0 0
  %518 = vmatpush2.bf16.msra.mxu0 0
  %519 = vmatprep.subr.bf16.mxu0 0
  %520 = vmatpush2.bf16.msra.mxu0 0
  %521 = vmatprep.subr.bf16.mxu0 0
  %522 = vmatpush2.bf16.msra.mxu0 0
  %523 = vmatprep.subr.bf16.mxu0 0
  %524 = vmatpush2.bf16.msra.mxu0 0
  %525 = vmatprep.subr.bf16.mxu0 0
  %526 = vmatpush2.bf16.msra.mxu0 0
  %527 = vmatprep.subr.bf16.mxu0 0
  %528 = vmatpush2.bf16.msra.mxu0 0
  %529 = vmatprep.subr.bf16.mxu0 0
  %530 = vmatpush2.bf16.msra.mxu0 0
  %531 = vmatprep.subr.bf16.mxu0 0
  %532 = vmatpush2.bf16.msra.mxu0 0
  %533 = vmatprep.mubr.bf16.mxu0 0
  %534 = vmatmul.mubr.bf16.gmra.mxu0 0
  %v535 = vpop.f32.mrf.mxu0
  %v536 = vadd.f32 0.0, %v535
  %v537 = vpop.f32.mrf.mxu0
  %v538 = vpop.f32.mrf.mxu0
  %v539 = vpop.f32.mrf.mxu0
  %540 = vdwg.mxu0
  %v541 = vadd.f32 %v297, %v495
  %v542 = vadd.f32 %v298, %v497
  %v543 = vxor.u32 %v541, 2147483648
  %v544 = vxor.u32 %v542, 2147483648
  %v545 = vmul.f32 %v543, 1.442695
  %v546 = vpow.pop %v545
  %v547 = vmul.f32 %v544, 1.442695
  %v548 = vpow.pop %v547
  %v549 = vadd.f32 %v546, 1.0
  %v550 = vadd.f32 %v548, 1.0
  %v551 = vrcp.pop %v549
  %v552 = vmul.f32 1.0, %v551
  %v553 = vrcp.pop %v550
  %v554 = vmul.f32 1.0, %v553
  %v555 = vadd.f32 %v536, %v292
  %v556 = vmul.f32 %v552, %v555
  %v557 = vadd.f32 %v299, %v556
  %v558 = vtanh.pop %v557
  %v559 = vsub.f32 1.0, %v554
  %v560 = vmul.f32 %v559, %v558
  %v561 = vmul.f32 %v554, 0.0
  %v562 = vadd.f32 %v560, %v561
  %s563 = smul.u32 1, 3
  %s564 = smul.addr %s563, 8
  %s565 = scalar_lea.vmem [#allocation2], %s564
  %v566 = vld [vmem:[%s565] sm:$0xff]
  %v567 = vld [vmem:[%s565 + $0x8] sm:$0xff]
  %v568 = vld [vmem:[%s565 + $0x10] sm:$0xff]
  %v569 = vpack.c.bf16 %v562, %v562
  %570 = vmatprep.subr.bf16.mxu0 %v434
  %571 = vmatpush1.bf16.msra.mxu0 %v433
  %572 = vmatprep.subr.bf16.mxu0 %v431
  %573 = vmatpush1.bf16.msra.mxu0 %v430
  %574 = vmatprep.subr.bf16.mxu0 %v428
  %575 = vmatpush1.bf16.msra.mxu0 %v427
  %576 = vmatprep.subr.bf16.mxu0 %v425
  %577 = vmatpush1.bf16.msra.mxu0 %v424
  %578 = vmatprep.subr.bf16.mxu0 %v422
  %579 = vmatpush1.bf16.msra.mxu0 %v421
  %580 = vmatprep.subr.bf16.mxu0 %v419
  %581 = vmatpush1.bf16.msra.mxu0 %v418
  %582 = vmatprep.subr.bf16.mxu0 %v416
  %583 = vmatpush1.bf16.msra.mxu0 %v415
  %584 = vmatprep.subr.bf16.mxu0 %v413
  %585 = vmatpush1.bf16.msra.mxu0 %v412
  %586 = vmatprep.subr.bf16.mxu0 0
  %587 = vmatpush2.bf16.msra.mxu0 0
  %588 = vmatprep.subr.bf16.mxu0 0
  %589 = vmatpush2.bf16.msra.mxu0 0
  %590 = vmatprep.subr.bf16.mxu0 0
  %591 = vmatpush2.bf16.msra.mxu0 0
  %592 = vmatprep.subr.bf16.mxu0 0
  %593 = vmatpush2.bf16.msra.mxu0 0
  %594 = vmatprep.subr.bf16.mxu0 0
  %595 = vmatpush2.bf16.msra.mxu0 0
  %596 = vmatprep.subr.bf16.mxu0 0
  %597 = vmatpush2.bf16.msra.mxu0 0
  %598 = vmatprep.subr.bf16.mxu0 0
  %599 = vmatpush2.bf16.msra.mxu0 0
  %600 = vmatprep.subr.bf16.mxu0 0
  %601 = vmatpush2.bf16.msra.mxu0 0
  %602 = vmatprep.mubr.bf16.mxu0 0
  %603 = vmatmul.mubr.bf16.gmra.mxu0 %v569
  %v604 = vpop.f32.mrf.mxu0
  %v605 = vadd.f32 0.0, %v604
  %v606 = vpop.f32.mrf.mxu0
  %v607 = vadd.f32 0.0, %v606
  %v608 = vpop.f32.mrf.mxu0
  %v609 = vpop.f32.mrf.mxu0
  %610 = vdwg.mxu0
  %611 = vmatprep.subr.bf16.mxu0 0
  %612 = vmatpush1.bf16.msra.mxu0 %v435
  %613 = vmatprep.subr.bf16.mxu0 0
  %614 = vmatpush1.bf16.msra.mxu0 %v432
  %615 = vmatprep.subr.bf16.mxu0 0
  %616 = vmatpush1.bf16.msra.mxu0 %v429
  %617 = vmatprep.subr.bf16.mxu0 0
  %618 = vmatpush1.bf16.msra.mxu0 %v426
  %619 = vmatprep.subr.bf16.mxu0 0
  %620 = vmatpush1.bf16.msra.mxu0 %v423
  %621 = vmatprep.subr.bf16.mxu0 0
  %622 = vmatpush1.bf16.msra.mxu0 %v420
  %623 = vmatprep.subr.bf16.mxu0 0
  %624 = vmatpush1.bf16.msra.mxu0 %v417
  %625 = vmatprep.subr.bf16.mxu0 0
  %626 = vmatpush1.bf16.msra.mxu0 %v414
  %627 = vmatprep.subr.bf16.mxu0 0
  %628 = vmatpush2.bf16.msra.mxu0 0
  %629 = vmatprep.subr.bf16.mxu0 0
  %630 = vmatpush2.bf16.msra.mxu0 0
  %631 = vmatprep.subr.bf16.mxu0 0
  %632 = vmatpush2.bf16.msra.mxu0 0
  %633 = vmatprep.subr.bf16.mxu0 0
  %634 = vmatpush2.bf16.msra.mxu0 0
  %635 = vmatprep.subr.bf16.mxu0 0
  %636 = vmatpush2.bf16.msra.mxu0 0
  %637 = vmatprep.subr.bf16.mxu0 0
  %638 = vmatpush2.bf16.msra.mxu0 0
  %639 = vmatprep.subr.bf16.mxu0 0
  %640 = vmatpush2.bf16.msra.mxu0 0
  %641 = vmatprep.subr.bf16.mxu0 0
  %642 = vmatpush2.bf16.msra.mxu0 0
  %643 = vmatprep.mubr.bf16.mxu0 0
  %644 = vmatmul.mubr.bf16.gmra.mxu0 %v569
  %v645 = vpop.f32.mrf.mxu0
  %v646 = vadd.f32 0.0, %v645
  %v647 = vpop.f32.mrf.mxu0
  %v648 = vpop.f32.mrf.mxu0
  %v649 = vpop.f32.mrf.mxu0
  %650 = vdwg.mxu0
  %v651 = vadd.f32 %v566, %v605
  %v652 = vadd.f32 %v567, %v607
  %v653 = vxor.u32 %v651, 2147483648
  %v654 = vxor.u32 %v652, 2147483648
  %v655 = vmul.f32 %v653, 1.442695
  %v656 = vpow.pop %v655
  %v657 = vmul.f32 %v654, 1.442695
  %v658 = vpow.pop %v657
  %v659 = vadd.f32 %v656, 1.0
  %v660 = vadd.f32 %v658, 1.0
  %v661 = vrcp.pop %v659
  %v662 = vmul.f32 1.0, %v661
  %v663 = vrcp.pop %v660
  %v664 = vmul.f32 1.0, %v663
  %v665 = vadd.f32 %v646, %v292
  %v666 = vmul.f32 %v662, %v665
  %v667 = vadd.f32 %v568, %v666
  %v668 = vtanh.pop %v667
  %v669 = vsub.f32 1.0, %v664
  %v670 = vmul.f32 %v669, %v668
  %v671 = vmul.f32 %v664, %v562
  %v672 = vadd.f32 %v670, %v671
  %s673 = smul.u32 2, 3
  %s674 = smul.addr %s673, 8
  %s675 = scalar_lea.vmem [#allocation2], %s674
  %v676 = vld [vmem:[%s675] sm:$0xff]
  %v677 = vld [vmem:[%s675 + $0x8] sm:$0xff]
  %v678 = vld [vmem:[%s675 + $0x10] sm:$0xff]
  %v679 = vpack.c.bf16 %v672, %v672
  %680 = vmatprep.subr.bf16.mxu0 %v434
  %681 = vmatpush1.bf16.msra.mxu0 %v433
  %682 = vmatprep.subr.bf16.mxu0 %v431
  %683 = vmatpush1.bf16.msra.mxu0 %v430
  %684 = vmatprep.subr.bf16.mxu0 %v428
  %685 = vmatpush1.bf16.msra.mxu0 %v427
  %686 = vmatprep.subr.bf16.mxu0 %v425
  %687 = vmatpush1.bf16.msra.mxu0 %v424
  %688 = vmatprep.subr.bf16.mxu0 %v422
  %689 = vmatpush1.bf16.msra.mxu0 %v421
  %690 = vmatprep.subr.bf16.mxu0 %v419
  %691 = vmatpush1.bf16.msra.mxu0 %v418
  %692 = vmatprep.subr.bf16.mxu0 %v416
  %693 = vmatpush1.bf16.msra.mxu0 %v415
  %694 = vmatprep.subr.bf16.mxu0 %v413
  %695 = vmatpush1.bf16.msra.mxu0 %v412
  %696 = vmatprep.subr.bf16.mxu0 0
  %697 = vmatpush2.bf16.msra.mxu0 0
  %698 = vmatprep.subr.bf16.mxu0 0
  %699 = vmatpush2.bf16.msra.mxu0 0
  %700 = vmatprep.subr.bf16.mxu0 0
  %701 = vmatpush2.bf16.msra.mxu0 0
  %702 = vmatprep.subr.bf16.mxu0 0
  %703 = vmatpush2.bf16.msra.mxu0 0
  %704 = vmatprep.subr.bf16.mxu0 0
  %705 = vmatpush2.bf16.msra.mxu0 0
  %706 = vmatprep.subr.bf16.mxu0 0
  %707 = vmatpush2.bf16.msra.mxu0 0
  %708 = vmatprep.subr.bf16.mxu0 0
  %709 = vmatpush2.bf16.msra.mxu0 0
  %710 = vmatprep.subr.bf16.mxu0 0
  %711 = vmatpush2.bf16.msra.mxu0 0
  %712 = vmatprep.mubr.bf16.mxu0 0
  %713 = vmatmul.mubr.bf16.gmra.mxu0 %v679
  %v714 = vpop.f32.mrf.mxu0
  %v715 = vadd.f32 0.0, %v714
  %v716 = vpop.f32.mrf.mxu0
  %v717 = vadd.f32 0.0, %v716
  %v718 = vpop.f32.mrf.mxu0
  %v719 = vpop.f32.mrf.mxu0
  %720 = vdwg.mxu0
  %721 = vmatprep.subr.bf16.mxu0 0
  %722 = vmatpush1.bf16.msra.mxu0 %v435
  %723 = vmatprep.subr.bf16.mxu0 0
  %724 = vmatpush1.bf16.msra.mxu0 %v432
  %725 = vmatprep.subr.bf16.mxu0 0
  %726 = vmatpush1.bf16.msra.mxu0 %v429
  %727 = vmatprep.subr.bf16.mxu0 0
  %728 = vmatpush1.bf16.msra.mxu0 %v426
  %729 = vmatprep.subr.bf16.mxu0 0
  %730 = vmatpush1.bf16.msra.mxu0 %v423
  %731 = vmatprep.subr.bf16.mxu0 0
  %732 = vmatpush1.bf16.msra.mxu0 %v420
  %733 = vmatprep.subr.bf16.mxu0 0
  %734 = vmatpush1.bf16.msra.mxu0 %v417
  %735 = vmatprep.subr.bf16.mxu0 0
  %736 = vmatpush1.bf16.msra.mxu0 %v414
  %737 = vmatprep.subr.bf16.mxu0 0
  %738 = vmatpush2.bf16.msra.mxu0 0
  %739 = vmatprep.subr.bf16.mxu0 0
  %740 = vmatpush2.bf16.msra.mxu0 0
  %741 = vmatprep.subr.bf16.mxu0 0
  %742 = vmatpush2.bf16.msra.mxu0 0
  %743 = vmatprep.subr.bf16.mxu0 0
  %744 = vmatpush2.bf16.msra.mxu0 0
  %745 = vmatprep.subr.bf16.mxu0 0
  %746 = vmatpush2.bf16.msra.mxu0 0
  %747 = vmatprep.subr.bf16.mxu0 0
  %748 = vmatpush2.bf16.msra.mxu0 0
  %749 = vmatprep.subr.bf16.mxu0 0
  %750 = vmatpush2.bf16.msra.mxu0 0
  %751 = vmatprep.subr.bf16.mxu0 0
  %752 = vmatpush2.bf16.msra.mxu0 0
  %753 = vmatprep.mubr.bf16.mxu0 0
  %754 = vmatmul.mubr.bf16.gmra.mxu0 %v679
  %v755 = vpop.f32.mrf.mxu0
  %v756 = vadd.f32 0.0, %v755
  %v757 = vpop.f32.mrf.mxu0
  %v758 = vpop.f32.mrf.mxu0
  %v759 = vpop.f32.mrf.mxu0
  %760 = vdwg.mxu0
  %v761 = vadd.f32 %v676, %v715
  %v762 = vadd.f32 %v677, %v717
  %v763 = vxor.u32 %v761, 2147483648
  %v764 = vxor.u32 %v762, 2147483648
  %v765 = vmul.f32 %v763, 1.442695
  %v766 = vpow.pop %v765
  %v767 = vmul.f32 %v764, 1.442695
  %v768 = vpow.pop %v767
  %v769 = vadd.f32 %v766, 1.0
  %v770 = vadd.f32 %v768, 1.0
  %v771 = vrcp.pop %v769
  %v772 = vmul.f32 1.0, %v771
  %v773 = vrcp.pop %v770
  %v774 = vmul.f32 1.0, %v773
  %v775 = vadd.f32 %v756, %v292
  %v776 = vmul.f32 %v772, %v775
  %v777 = vadd.f32 %v678, %v776
  %v778 = vtanh.pop %v777
  %v779 = vsub.f32 1.0, %v774
  %v780 = vmul.f32 %v779, %v778
  %v781 = vmul.f32 %v774, %v672
  %v782 = vadd.f32 %v780, %v781
  %s783 = smul.u32 3, 3
  %s784 = smul.addr %s783, 8
  %s785 = scalar_lea.vmem [#allocation2], %s784
  %v786 = vld [vmem:[%s785] sm:$0xff]
  %v787 = vld [vmem:[%s785 + $0x8] sm:$0xff]
  %v788 = vld [vmem:[%s785 + $0x10] sm:$0xff]
  %v789 = vpack.c.bf16 %v782, %v782
  %790 = vmatprep.subr.bf16.mxu0 %v434
  %791 = vmatpush1.bf16.msra.mxu0 %v433
  %792 = vmatprep.subr.bf16.mxu0 %v431
  %793 = vmatpush1.bf16.msra.mxu0 %v430
  %794 = vmatprep.subr.bf16.mxu0 %v428
  %795 = vmatpush1.bf16.msra.mxu0 %v427
  %796 = vmatprep.subr.bf16.mxu0 %v425
  %797 = vmatpush1.bf16.msra.mxu0 %v424
  %798 = vmatprep.subr.bf16.mxu0 %v422
  %799 = vmatpush1.bf16.msra.mxu0 %v421
  %800 = vmatprep.subr.bf16.mxu0 %v419
  %801 = vmatpush1.bf16.msra.mxu0 %v418
  %802 = vmatprep.subr.bf16.mxu0 %v416
  %803 = vmatpush1.bf16.msra.mxu0 %v415
  %804 = vmatprep.subr.bf16.mxu0 %v413
  %805 = vmatpush1.bf16.msra.mxu0 %v412
  %806 = vmatprep.subr.bf16.mxu0 0
  %807 = vmatpush2.bf16.msra.mxu0 0
  %808 = vmatprep.subr.bf16.mxu0 0
  %809 = vmatpush2.bf16.msra.mxu0 0
  %810 = vmatprep.subr.bf16.mxu0 0
  %811 = vmatpush2.bf16.msra.mxu0 0
  %812 = vmatprep.subr.bf16.mxu0 0
  %813 = vmatpush2.bf16.msra.mxu0 0
  %814 = vmatprep.subr.bf16.mxu0 0
  %815 = vmatpush2.bf16.msra.mxu0 0
  %816 = vmatprep.subr.bf16.mxu0 0
  %817 = vmatpush2.bf16.msra.mxu0 0
  %818 = vmatprep.subr.bf16.mxu0 0
  %819 = vmatpush2.bf16.msra.mxu0 0
  %820 = vmatprep.subr.bf16.mxu0 0
  %821 = vmatpush2.bf16.msra.mxu0 0
  %822 = vmatprep.mubr.bf16.mxu0 0
  %823 = vmatmul.mubr.bf16.gmra.mxu0 %v789
  %v824 = vpop.f32.mrf.mxu0
  %v825 = vadd.f32 0.0, %v824
  %v826 = vpop.f32.mrf.mxu0
  %v827 = vadd.f32 0.0, %v826
  %v828 = vpop.f32.mrf.mxu0
  %v829 = vpop.f32.mrf.mxu0
  %830 = vdwg.mxu0
  %831 = vmatprep.subr.bf16.mxu0 0
  %832 = vmatpush1.bf16.msra.mxu0 %v435
  %833 = vmatprep.subr.bf16.mxu0 0
  %834 = vmatpush1.bf16.msra.mxu0 %v432
  %835 = vmatprep.subr.bf16.mxu0 0
  %836 = vmatpush1.bf16.msra.mxu0 %v429
  %837 = vmatprep.subr.bf16.mxu0 0
  %838 = vmatpush1.bf16.msra.mxu0 %v426
  %839 = vmatprep.subr.bf16.mxu0 0
  %840 = vmatpush1.bf16.msra.mxu0 %v423
  %841 = vmatprep.subr.bf16.mxu0 0
  %842 = vmatpush1.bf16.msra.mxu0 %v420
  %843 = vmatprep.subr.bf16.mxu0 0
  %844 = vmatpush1.bf16.msra.mxu0 %v417
  %845 = vmatprep.subr.bf16.mxu0 0
  %846 = vmatpush1.bf16.msra.mxu0 %v414
  %847 = vmatprep.subr.bf16.mxu0 0
  %848 = vmatpush2.bf16.msra.mxu0 0
  %849 = vmatprep.subr.bf16.mxu0 0
  %850 = vmatpush2.bf16.msra.mxu0 0
  %851 = vmatprep.subr.bf16.mxu0 0
  %852 = vmatpush2.bf16.msra.mxu0 0
  %853 = vmatprep.subr.bf16.mxu0 0
  %854 = vmatpush2.bf16.msra.mxu0 0
  %855 = vmatprep.subr.bf16.mxu0 0
  %856 = vmatpush2.bf16.msra.mxu0 0
  %857 = vmatprep.subr.bf16.mxu0 0
  %858 = vmatpush2.bf16.msra.mxu0 0
  %859 = vmatprep.subr.bf16.mxu0 0
  %860 = vmatpush2.bf16.msra.mxu0 0
  %861 = vmatprep.subr.bf16.mxu0 0
  %862 = vmatpush2.bf16.msra.mxu0 0
  %863 = vmatprep.mubr.bf16.mxu0 0
  %864 = vmatmul.mubr.bf16.gmra.mxu0 %v789
  %v865 = vpop.f32.mrf.mxu0
  %v866 = vadd.f32 0.0, %v865
  %v867 = vpop.f32.mrf.mxu0
  %v868 = vpop.f32.mrf.mxu0
  %v869 = vpop.f32.mrf.mxu0
  %870 = vdwg.mxu0
  %v871 = vadd.f32 %v786, %v825
  %v872 = vadd.f32 %v787, %v827
  %v873 = vxor.u32 %v871, 2147483648
  %v874 = vxor.u32 %v872, 2147483648
  %v875 = vmul.f32 %v873, 1.442695
  %v876 = vpow.pop %v875
  %v877 = vmul.f32 %v874, 1.442695
  %v878 = vpow.pop %v877
  %v879 = vadd.f32 %v876, 1.0
  %v880 = vadd.f32 %v878, 1.0
  %v881 = vrcp.pop %v879
  %v882 = vmul.f32 1.0, %v881
  %v883 = vrcp.pop %v880
  %v884 = vmul.f32 1.0, %v883
  %v885 = vadd.f32 %v866, %v292
  %v886 = vmul.f32 %v882, %v885
  %v887 = vadd.f32 %v788, %v886
  %v888 = vtanh.pop %v887
  %v889 = vsub.f32 1.0, %v884
  %v890 = vmul.f32 %v889, %v888
  %v891 = vmul.f32 %v884, %v782
  %v892 = vadd.f32 %v890, %v891
  %s893 = smul.u32 4, 3
  %s894 = smul.addr %s893, 8
  %s895 = scalar_lea.vmem [#allocation2], %s894
  %v896 = vld [vmem:[%s895] sm:$0xff]
  %v897 = vld [vmem:[%s895 + $0x8] sm:$0xff]
  %v898 = vld [vmem:[%s895 + $0x10] sm:$0xff]
  %v899 = vpack.c.bf16 %v892, %v892
  %900 = vmatprep.subr.bf16.mxu0 %v434
  %901 = vmatpush1.bf16.msra.mxu0 %v433
  %902 = vmatprep.subr.bf16.mxu0 %v431
  %903 = vmatpush1.bf16.msra.mxu0 %v430
  %904 = vmatprep.subr.bf16.mxu0 %v428
  %905 = vmatpush1.bf16.msra.mxu0 %v427
  %906 = vmatprep.subr.bf16.mxu0 %v425
  %907 = vmatpush1.bf16.msra.mxu0 %v424
  %908 = vmatprep.subr.bf16.mxu0 %v422
  %909 = vmatpush1.bf16.msra.mxu0 %v421
  %910 = vmatprep.subr.bf16.mxu0 %v419
  %911 = vmatpush1.bf16.msra.mxu0 %v418
  %912 = vmatprep.subr.bf16.mxu0 %v416
  %913 = vmatpush1.bf16.msra.mxu0 %v415
  %914 = vmatprep.subr.bf16.mxu0 %v413
  %915 = vmatpush1.bf16.msra.mxu0 %v412
  %916 = vmatprep.subr.bf16.mxu0 0
  %917 = vmatpush2.bf16.msra.mxu0 0
  %918 = vmatprep.subr.bf16.mxu0 0
  %919 = vmatpush2.bf16.msra.mxu0 0
  %920 = vmatprep.subr.bf16.mxu0 0
  %921 = vmatpush2.bf16.msra.mxu0 0
  %922 = vmatprep.subr.bf16.mxu0 0
  %923 = vmatpush2.bf16.msra.mxu0 0
  %924 = vmatprep.subr.bf16.mxu0 0
  %925 = vmatpush2.bf16.msra.mxu0 0
  %926 = vmatprep.subr.bf16.mxu0 0
  %927 = vmatpush2.bf16.msra.mxu0 0
  %928 = vmatprep.subr.bf16.mxu0 0
  %929 = vmatpush2.bf16.msra.mxu0 0
  %930 = vmatprep.subr.bf16.mxu0 0
  %931 = vmatpush2.bf16.msra.mxu0 0
  %932 = vmatprep.mubr.bf16.mxu0 0
  %933 = vmatmul.mubr.bf16.gmra.mxu0 %v899
  %v934 = vpop.f32.mrf.mxu0
  %v935 = vadd.f32 0.0, %v934
  %v936 = vpop.f32.mrf.mxu0
  %v937 = vadd.f32 0.0, %v936
  %v938 = vpop.f32.mrf.mxu0
  %v939 = vpop.f32.mrf.mxu0
  %940 = vdwg.mxu0
  %941 = vmatprep.subr.bf16.mxu0 0
  %942 = vmatpush1.bf16.msra.mxu0 %v435
  %943 = vmatprep.subr.bf16.mxu0 0
  %944 = vmatpush1.bf16.msra.mxu0 %v432
  %945 = vmatprep.subr.bf16.mxu0 0
  %946 = vmatpush1.bf16.msra.mxu0 %v429
  %947 = vmatprep.subr.bf16.mxu0 0
  %948 = vmatpush1.bf16.msra.mxu0 %v426
  %949 = vmatprep.subr.bf16.mxu0 0
  %950 = vmatpush1.bf16.msra.mxu0 %v423
  %951 = vmatprep.subr.bf16.mxu0 0
  %952 = vmatpush1.bf16.msra.mxu0 %v420
  %953 = vmatprep.subr.bf16.mxu0 0
  %954 = vmatpush1.bf16.msra.mxu0 %v417
  %955 = vmatprep.subr.bf16.mxu0 0
  %956 = vmatpush1.bf16.msra.mxu0 %v414
  %957 = vmatprep.subr.bf16.mxu0 0
  %958 = vmatpush2.bf16.msra.mxu0 0
  %959 = vmatprep.subr.bf16.mxu0 0
  %960 = vmatpush2.bf16.msra.mxu0 0
  %961 = vmatprep.subr.bf16.mxu0 0
  %962 = vmatpush2.bf16.msra.mxu0 0
  %963 = vmatprep.subr.bf16.mxu0 0
  %964 = vmatpush2.bf16.msra.mxu0 0
  %965 = vmatprep.subr.bf16.mxu0 0
  %966 = vmatpush2.bf16.msra.mxu0 0
  %967 = vmatprep.subr.bf16.mxu0 0
  %968 = vmatpush2.bf16.msra.mxu0 0
  %969 = vmatprep.subr.bf16.mxu0 0
  %970 = vmatpush2.bf16.msra.mxu0 0
  %971 = vmatprep.subr.bf16.mxu0 0
  %972 = vmatpush2.bf16.msra.mxu0 0
  %973 = vmatprep.mubr.bf16.mxu0 0
  %974 = vmatmul.mubr.bf16.gmra.mxu0 %v899
  %v975 = vpop.f32.mrf.mxu0
  %v976 = vadd.f32 0.0, %v975
  %v977 = vpop.f32.mrf.mxu0
  %v978 = vpop.f32.mrf.mxu0
  %v979 = vpop.f32.mrf.mxu0
  %980 = vdwg.mxu0
  %v981 = vadd.f32 %v896, %v935
  %v982 = vadd.f32 %v897, %v937
  %v983 = vxor.u32 %v981, 2147483648
  %v984 = vxor.u32 %v982, 2147483648
  %v985 = vmul.f32 %v983, 1.442695
  %v986 = vpow.pop %v985
  %v987 = vmul.f32 %v984, 1.442695
  %v988 = vpow.pop %v987
  %v989 = vadd.f32 %v986, 1.0
  %v990 = vadd.f32 %v988, 1.0
  %v991 = vrcp.pop %v989
  %v992 = vmul.f32 1.0, %v991
  %v993 = vrcp.pop %v990
  %v994 = vmul.f32 1.0, %v993
  %v995 = vadd.f32 %v976, %v292
  %v996 = vmul.f32 %v992, %v995
  %v997 = vadd.f32 %v898, %v996
  %v998 = vtanh.pop %v997
  %v999 = vsub.f32 1.0, %v994
  %v1000 = vmul.f32 %v999, %v998
  %v1001 = vmul.f32 %v994, %v892
  %v1002 = vadd.f32 %v1000, %v1001
  %s1003 = smul.u32 5, 3
  %s1004 = smul.addr %s1003, 8
  %s1005 = scalar_lea.vmem [#allocation2], %s1004
  %v1006 = vld [vmem:[%s1005] sm:$0xff]
  %v1007 = vld [vmem:[%s1005 + $0x8] sm:$0xff]
  %v1008 = vld [vmem:[%s1005 + $0x10] sm:$0xff]
  %v1009 = vpack.c.bf16 %v1002, %v1002
  %1010 = vmatprep.subr.bf16.mxu0 %v434
  %1011 = vmatpush1.bf16.msra.mxu0 %v433
  %1012 = vmatprep.subr.bf16.mxu0 %v431
  %1013 = vmatpush1.bf16.msra.mxu0 %v430
  %1014 = vmatprep.subr.bf16.mxu0 %v428
  %1015 = vmatpush1.bf16.msra.mxu0 %v427
  %1016 = vmatprep.subr.bf16.mxu0 %v425
  %1017 = vmatpush1.bf16.msra.mxu0 %v424
  %1018 = vmatprep.subr.bf16.mxu0 %v422
  %1019 = vmatpush1.bf16.msra.mxu0 %v421
  %1020 = vmatprep.subr.bf16.mxu0 %v419
  %1021 = vmatpush1.bf16.msra.mxu0 %v418
  %1022 = vmatprep.subr.bf16.mxu0 %v416
  %1023 = vmatpush1.bf16.msra.mxu0 %v415
  %1024 = vmatprep.subr.bf16.mxu0 %v413
  %1025 = vmatpush1.bf16.msra.mxu0 %v412
  %1026 = vmatprep.subr.bf16.mxu0 0
  %1027 = vmatpush2.bf16.msra.mxu0 0
  %1028 = vmatprep.subr.bf16.mxu0 0
  %1029 = vmatpush2.bf16.msra.mxu0 0
  %1030 = vmatprep.subr.bf16.mxu0 0
  %1031 = vmatpush2.bf16.msra.mxu0 0
  %1032 = vmatprep.subr.bf16.mxu0 0
  %1033 = vmatpush2.bf16.msra.mxu0 0
  %1034 = vmatprep.subr.bf16.mxu0 0
  %1035 = vmatpush2.bf16.msra.mxu0 0
  %1036 = vmatprep.subr.bf16.mxu0 0
  %1037 = vmatpush2.bf16.msra.mxu0 0
  %1038 = vmatprep.subr.bf16.mxu0 0
  %1039 = vmatpush2.bf16.msra.mxu0 0
  %1040 = vmatprep.subr.bf16.mxu0 0
  %1041 = vmatpush2.bf16.msra.mxu0 0
  %1042 = vmatprep.mubr.bf16.mxu0 0
  %1043 = vmatmul.mubr.bf16.gmra.mxu0 %v1009
  %v1044 = vpop.f32.mrf.mxu0
  %v1045 = vadd.f32 0.0, %v1044
  %v1046 = vpop.f32.mrf.mxu0
  %v1047 = vadd.f32 0.0, %v1046
  %v1048 = vpop.f32.mrf.mxu0
  %v1049 = vpop.f32.mrf.mxu0
  %1050 = vdwg.mxu0
  %1051 = vmatprep.subr.bf16.mxu0 0
  %1052 = vmatpush1.bf16.msra.mxu0 %v435
  %1053 = vmatprep.subr.bf16.mxu0 0
  %1054 = vmatpush1.bf16.msra.mxu0 %v432
  %1055 = vmatprep.subr.bf16.mxu0 0
  %1056 = vmatpush1.bf16.msra.mxu0 %v429
  %1057 = vmatprep.subr.bf16.mxu0 0
  %1058 = vmatpush1.bf16.msra.mxu0 %v426
  %1059 = vmatprep.subr.bf16.mxu0 0
  %1060 = vmatpush1.bf16.msra.mxu0 %v423
  %1061 = vmatprep.subr.bf16.mxu0 0
  %1062 = vmatpush1.bf16.msra.mxu0 %v420
  %1063 = vmatprep.subr.bf16.mxu0 0
  %1064 = vmatpush1.bf16.msra.mxu0 %v417
  %1065 = vmatprep.subr.bf16.mxu0 0
  %1066 = vmatpush1.bf16.msra.mxu0 %v414
  %1067 = vmatprep.subr.bf16.mxu0 0
  %1068 = vmatpush2.bf16.msra.mxu0 0
  %1069 = vmatprep.subr.bf16.mxu0 0
  %1070 = vmatpush2.bf16.msra.mxu0 0
  %1071 = vmatprep.subr.bf16.mxu0 0
  %1072 = vmatpush2.bf16.msra.mxu0 0
  %1073 = vmatprep.subr.bf16.mxu0 0
  %1074 = vmatpush2.bf16.msra.mxu0 0
  %1075 = vmatprep.subr.bf16.mxu0 0
  %1076 = vmatpush2.bf16.msra.mxu0 0
  %1077 = vmatprep.subr.bf16.mxu0 0
  %1078 = vmatpush2.bf16.msra.mxu0 0
  %1079 = vmatprep.subr.bf16.mxu0 0
  %1080 = vmatpush2.bf16.msra.mxu0 0
  %1081 = vmatprep.subr.bf16.mxu0 0
  %1082 = vmatpush2.bf16.msra.mxu0 0
  %1083 = vmatprep.mubr.bf16.mxu0 0
  %1084 = vmatmul.mubr.bf16.gmra.mxu0 %v1009
  %v1085 = vpop.f32.mrf.mxu0
  %v1086 = vadd.f32 0.0, %v1085
  %v1087 = vpop.f32.mrf.mxu0
  %v1088 = vpop.f32.mrf.mxu0
  %v1089 = vpop.f32.mrf.mxu0
  %1090 = vdwg.mxu0
  %v1091 = vadd.f32 %v1006, %v1045
  %v1092 = vadd.f32 %v1007, %v1047
  %v1093 = vxor.u32 %v1091, 2147483648
  %v1094 = vxor.u32 %v1092, 2147483648
  %v1095 = vmul.f32 %v1093, 1.442695
  %v1096 = vpow.pop %v1095
  %v1097 = vmul.f32 %v1094, 1.442695
  %v1098 = vpow.pop %v1097
  %v1099 = vadd.f32 %v1096, 1.0
  %v1100 = vadd.f32 %v1098, 1.0
  %v1101 = vrcp.pop %v1099
  %v1102 = vmul.f32 1.0, %v1101
  %v1103 = vrcp.pop %v1100
  %v1104 = vmul.f32 1.0, %v1103
  %v1105 = vadd.f32 %v1086, %v292
  %v1106 = vmul.f32 %v1102, %v1105
  %v1107 = vadd.f32 %v1008, %v1106
  %v1108 = vtanh.pop %v1107
  %v1109 = vsub.f32 1.0, %v1104
  %v1110 = vmul.f32 %v1109, %v1108
  %v1111 = vmul.f32 %v1104, %v1002
  %v1112 = vadd.f32 %v1110, %v1111
  %s1113 = smul.u32 6, 3
  %s1114 = smul.addr %s1113, 8
  %s1115 = scalar_lea.vmem [#allocation2], %s1114
  %v1116 = vld [vmem:[%s1115] sm:$0xff]
  %v1117 = vld [vmem:[%s1115 + $0x8] sm:$0xff]
  %v1118 = vld [vmem:[%s1115 + $0x10] sm:$0xff]
  %v1119 = vpack.c.bf16 %v1112, %v1112
  %1120 = vmatprep.subr.bf16.mxu0 %v434
  %1121 = vmatpush1.bf16.msra.mxu0 %v433
  %1122 = vmatprep.subr.bf16.mxu0 %v431
  %1123 = vmatpush1.bf16.msra.mxu0 %v430
  %1124 = vmatprep.subr.bf16.mxu0 %v428
  %1125 = vmatpush1.bf16.msra.mxu0 %v427
  %1126 = vmatprep.subr.bf16.mxu0 %v425
  %1127 = vmatpush1.bf16.msra.mxu0 %v424
  %1128 = vmatprep.subr.bf16.mxu0 %v422
  %1129 = vmatpush1.bf16.msra.mxu0 %v421
  %1130 = vmatprep.subr.bf16.mxu0 %v419
  %1131 = vmatpush1.bf16.msra.mxu0 %v418
  %1132 = vmatprep.subr.bf16.mxu0 %v416
  %1133 = vmatpush1.bf16.msra.mxu0 %v415
  %1134 = vmatprep.subr.bf16.mxu0 %v413
  %1135 = vmatpush1.bf16.msra.mxu0 %v412
  %1136 = vmatprep.subr.bf16.mxu0 0
  %1137 = vmatpush2.bf16.msra.mxu0 0
  %1138 = vmatprep.subr.bf16.mxu0 0
  %1139 = vmatpush2.bf16.msra.mxu0 0
  %1140 = vmatprep.subr.bf16.mxu0 0
  %1141 = vmatpush2.bf16.msra.mxu0 0
  %1142 = vmatprep.subr.bf16.mxu0 0
  %1143 = vmatpush2.bf16.msra.mxu0 0
  %1144 = vmatprep.subr.bf16.mxu0 0
  %1145 = vmatpush2.bf16.msra.mxu0 0
  %1146 = vmatprep.subr.bf16.mxu0 0
  %1147 = vmatpush2.bf16.msra.mxu0 0
  %1148 = vmatprep.subr.bf16.mxu0 0
  %1149 = vmatpush2.bf16.msra.mxu0 0
  %1150 = vmatprep.subr.bf16.mxu0 0
  %1151 = vmatpush2.bf16.msra.mxu0 0
  %1152 = vmatprep.mubr.bf16.mxu0 0
  %1153 = vmatmul.mubr.bf16.gmra.mxu0 %v1119
  %v1154 = vpop.f32.mrf.mxu0
  %v1155 = vadd.f32 0.0, %v1154
  %v1156 = vpop.f32.mrf.mxu0
  %v1157 = vadd.f32 0.0, %v1156
  %v1158 = vpop.f32.mrf.mxu0
  %v1159 = vpop.f32.mrf.mxu0
  %1160 = vdwg.mxu0
  %1161 = vmatprep.subr.bf16.mxu0 0
  %1162 = vmatpush1.bf16.msra.mxu0 %v435
  %1163 = vmatprep.subr.bf16.mxu0 0
  %1164 = vmatpush1.bf16.msra.mxu0 %v432
  %1165 = vmatprep.subr.bf16.mxu0 0
  %1166 = vmatpush1.bf16.msra.mxu0 %v429
  %1167 = vmatprep.subr.bf16.mxu0 0
  %1168 = vmatpush1.bf16.msra.mxu0 %v426
  %1169 = vmatprep.subr.bf16.mxu0 0
  %1170 = vmatpush1.bf16.msra.mxu0 %v423
  %1171 = vmatprep.subr.bf16.mxu0 0
  %1172 = vmatpush1.bf16.msra.mxu0 %v420
  %1173 = vmatprep.subr.bf16.mxu0 0
  %1174 = vmatpush1.bf16.msra.mxu0 %v417
  %1175 = vmatprep.subr.bf16.mxu0 0
  %1176 = vmatpush1.bf16.msra.mxu0 %v414
  %1177 = vmatprep.subr.bf16.mxu0 0
  %1178 = vmatpush2.bf16.msra.mxu0 0
  %1179 = vmatprep.subr.bf16.mxu0 0
  %1180 = vmatpush2.bf16.msra.mxu0 0
  %1181 = vmatprep.subr.bf16.mxu0 0
  %1182 = vmatpush2.bf16.msra.mxu0 0
  %1183 = vmatprep.subr.bf16.mxu0 0
  %1184 = vmatpush2.bf16.msra.mxu0 0
  %1185 = vmatprep.subr.bf16.mxu0 0
  %1186 = vmatpush2.bf16.msra.mxu0 0
  %1187 = vmatprep.subr.bf16.mxu0 0
  %1188 = vmatpush2.bf16.msra.mxu0 0
  %1189 = vmatprep.subr.bf16.mxu0 0
  %1190 = vmatpush2.bf16.msra.mxu0 0
  %1191 = vmatprep.subr.bf16.mxu0 0
  %1192 = vmatpush2.bf16.msra.mxu0 0
  %1193 = vmatprep.mubr.bf16.mxu0 0
  %1194 = vmatmul.mubr.bf16.gmra.mxu0 %v1119
  %v1195 = vpop.f32.mrf.mxu0
  %v1196 = vadd.f32 0.0, %v1195
  %v1197 = vpop.f32.mrf.mxu0
  %v1198 = vpop.f32.mrf.mxu0
  %v1199 = vpop.f32.mrf.mxu0
  %1200 = vdwg.mxu0
  %v1201 = vadd.f32 %v1116, %v1155
  %v1202 = vadd.f32 %v1117, %v1157
  %v1203 = vxor.u32 %v1201, 2147483648
  %v1204 = vxor.u32 %v1202, 2147483648
  %v1205 = vmul.f32 %v1203, 1.442695
  %v1206 = vpow.pop %v1205
  %v1207 = vmul.f32 %v1204, 1.442695
  %v1208 = vpow.pop %v1207
  %v1209 = vadd.f32 %v1206, 1.0
  %v1210 = vadd.f32 %v1208, 1.0
  %v1211 = vrcp.pop %v1209
  %v1212 = vmul.f32 1.0, %v1211
  %v1213 = vrcp.pop %v1210
  %v1214 = vmul.f32 1.0, %v1213
  %v1215 = vadd.f32 %v1196, %v292
  %v1216 = vmul.f32 %v1212, %v1215
  %v1217 = vadd.f32 %v1118, %v1216
  %v1218 = vtanh.pop %v1217
  %v1219 = vsub.f32 1.0, %v1214
  %v1220 = vmul.f32 %v1219, %v1218
  %v1221 = vmul.f32 %v1214, %v1112
  %v1222 = vadd.f32 %v1220, %v1221
  %s1223 = smul.u32 7, 3
  %s1224 = smul.addr %s1223, 8
  %s1225 = scalar_lea.vmem [#allocation2], %s1224
  %v1226 = vld [vmem:[%s1225] sm:$0xff]
  %v1227 = vld [vmem:[%s1225 + $0x8] sm:$0xff]
  %v1228 = vld [vmem:[%s1225 + $0x10] sm:$0xff]
  %v1229 = vpack.c.bf16 %v1222, %v1222
  %1230 = vmatprep.subr.bf16.mxu0 %v434
  %1231 = vmatpush1.bf16.msra.mxu0 %v433
  %1232 = vmatprep.subr.bf16.mxu0 %v431
  %1233 = vmatpush1.bf16.msra.mxu0 %v430
  %1234 = vmatprep.subr.bf16.mxu0 %v428
  %1235 = vmatpush1.bf16.msra.mxu0 %v427
  %1236 = vmatprep.subr.bf16.mxu0 %v425
  %1237 = vmatpush1.bf16.msra.mxu0 %v424
  %1238 = vmatprep.subr.bf16.mxu0 %v422
  %1239 = vmatpush1.bf16.msra.mxu0 %v421
  %1240 = vmatprep.subr.bf16.mxu0 %v419
  %1241 = vmatpush1.bf16.msra.mxu0 %v418
  %1242 = vmatprep.subr.bf16.mxu0 %v416
  %1243 = vmatpush1.bf16.msra.mxu0 %v415
  %1244 = vmatprep.subr.bf16.mxu0 %v413
  %1245 = vmatpush1.bf16.msra.mxu0 %v412
  %1246 = vmatprep.subr.bf16.mxu0 0
  %1247 = vmatpush2.bf16.msra.mxu0 0
  %1248 = vmatprep.subr.bf16.mxu0 0
  %1249 = vmatpush2.bf16.msra.mxu0 0
  %1250 = vmatprep.subr.bf16.mxu0 0
  %1251 = vmatpush2.bf16.msra.mxu0 0
  %1252 = vmatprep.subr.bf16.mxu0 0
  %1253 = vmatpush2.bf16.msra.mxu0 0
  %1254 = vmatprep.subr.bf16.mxu0 0
  %1255 = vmatpush2.bf16.msra.mxu0 0
  %1256 = vmatprep.subr.bf16.mxu0 0
  %1257 = vmatpush2.bf16.msra.mxu0 0
  %1258 = vmatprep.subr.bf16.mxu0 0
  %1259 = vmatpush2.bf16.msra.mxu0 0
  %1260 = vmatprep.subr.bf16.mxu0 0
  %1261 = vmatpush2.bf16.msra.mxu0 0
  %1262 = vmatprep.mubr.bf16.mxu0 0
  %1263 = vmatmul.mubr.bf16.gmra.mxu0 %v1229
  %v1264 = vpop.f32.mrf.mxu0
  %v1265 = vadd.f32 0.0, %v1264
  %v1266 = vpop.f32.mrf.mxu0
  %v1267 = vadd.f32 0.0, %v1266
  %v1268 = vpop.f32.mrf.mxu0
  %v1269 = vpop.f32.mrf.mxu0
  %1270 = vdwg.mxu0
  %1271 = vmatprep.subr.bf16.mxu0 0
  %1272 = vmatpush1.bf16.msra.mxu0 %v435
  %1273 = vmatprep.subr.bf16.mxu0 0
  %1274 = vmatpush1.bf16.msra.mxu0 %v432
  %1275 = vmatprep.subr.bf16.mxu0 0
  %1276 = vmatpush1.bf16.msra.mxu0 %v429
  %1277 = vmatprep.subr.bf16.mxu0 0
  %1278 = vmatpush1.bf16.msra.mxu0 %v426
  %1279 = vmatprep.subr.bf16.mxu0 0
  %1280 = vmatpush1.bf16.msra.mxu0 %v423
  %1281 = vmatprep.subr.bf16.mxu0 0
  %1282 = vmatpush1.bf16.msra.mxu0 %v420
  %1283 = vmatprep.subr.bf16.mxu0 0
  %1284 = vmatpush1.bf16.msra.mxu0 %v417
  %1285 = vmatprep.subr.bf16.mxu0 0
  %1286 = vmatpush1.bf16.msra.mxu0 %v414
  %1287 = vmatprep.subr.bf16.mxu0 0
  %1288 = vmatpush2.bf16.msra.mxu0 0
  %1289 = vmatprep.subr.bf16.mxu0 0
  %1290 = vmatpush2.bf16.msra.mxu0 0
  %1291 = vmatprep.subr.bf16.mxu0 0
  %1292 = vmatpush2.bf16.msra.mxu0 0
  %1293 = vmatprep.subr.bf16.mxu0 0
  %1294 = vmatpush2.bf16.msra.mxu0 0
  %1295 = vmatprep.subr.bf16.mxu0 0
  %1296 = vmatpush2.bf16.msra.mxu0 0
  %1297 = vmatprep.subr.bf16.mxu0 0
  %1298 = vmatpush2.bf16.msra.mxu0 0
  %1299 = vmatprep.subr.bf16.mxu0 0
  %1300 = vmatpush2.bf16.msra.mxu0 0
  %1301 = vmatprep.subr.bf16.mxu0 0
  %1302 = vmatpush2.bf16.msra.mxu0 0
  %1303 = vmatprep.mubr.bf16.mxu0 0
  %1304 = vmatmul.mubr.bf16.gmra.mxu0 %v1229
  %v1305 = vpop.f32.mrf.mxu0
  %v1306 = vadd.f32 0.0, %v1305
  %v1307 = vpop.f32.mrf.mxu0
  %v1308 = vpop.f32.mrf.mxu0
  %v1309 = vpop.f32.mrf.mxu0
  %1310 = vdwg.mxu0
  %v1311 = vadd.f32 %v1226, %v1265
  %v1312 = vadd.f32 %v1227, %v1267
  %v1313 = vxor.u32 %v1311, 2147483648
  %v1314 = vxor.u32 %v1312, 2147483648
  %v1315 = vmul.f32 %v1313, 1.442695
  %v1316 = vpow.pop %v1315
  %v1317 = vmul.f32 %v1314, 1.442695
  %v1318 = vpow.pop %v1317
  %v1319 = vadd.f32 %v1316, 1.0
  %v1320 = vadd.f32 %v1318, 1.0
  %v1321 = vrcp.pop %v1319
  %v1322 = vmul.f32 1.0, %v1321
  %v1323 = vrcp.pop %v1320
  %v1324 = vmul.f32 1.0, %v1323
  %v1325 = vadd.f32 %v1306, %v292
  %v1326 = vmul.f32 %v1322, %v1325
  %v1327 = vadd.f32 %v1228, %v1326
  %v1328 = vtanh.pop %v1327
  %v1329 = vsub.f32 1.0, %v1324
  %v1330 = vmul.f32 %v1329, %v1328
  %v1331 = vmul.f32 %v1324, %v1222
  %v1332 = vadd.f32 %v1330, %v1331
  %v1333 = vpack.c.bf16 %v1332, %v1332
  %v1334 = vld [vmem:[%s5] sm:$0xf]
  %v1335 = vld [vmem:[%s5 + $0x4] sm:$0xf]
  %v1336 = vld [vmem:[%s5 + $0x8] sm:$0xf]
  %v1337 = vld [vmem:[%s5 + $0xc] sm:$0xf]
  %v1338 = vld [vmem:[%s5 + $0x10] sm:$0xf]
  %v1339 = vld [vmem:[%s5 + $0x14] sm:$0xf]
  %v1340 = vld [vmem:[%s5 + $0x18] sm:$0xf]
  %v1341 = vld [vmem:[%s5 + $0x1c] sm:$0xf]
  %v1342 = vld [vmem:[%s5 + $0x20] sm:$0xf]
  %v1343 = vld [vmem:[%s5 + $0x24] sm:$0xf]
  %v1344 = vld [vmem:[%s5 + $0x28] sm:$0xf]
  %v1345 = vld [vmem:[%s5 + $0x2c] sm:$0xf]
  %v1346 = vld [vmem:[%s5 + $0x30] sm:$0xf]
  %v1347 = vld [vmem:[%s5 + $0x34] sm:$0xf]
  %v1348 = vld [vmem:[%s5 + $0x38] sm:$0xf]
  %v1349 = vld [vmem:[%s5 + $0x3c] sm:$0xf]
  %v1350 = vld [vmem:[%s6] sm:$0x1]
  %v1352 = vlaneseq
  %v1353 = vshrl.u32 %v1352, 7
  %v1354 = vsub.s32 0, %v1353
  %v1355 = vrot.slane %v1350, %v1354
  %v1373 = vunpack.c.l.b16 %v1334
  %v1374 = vunpack.c.l.b16 %v1335
  %v1375 = vunpack.c.l.b16 %v1336
  %v1376 = vunpack.c.l.b16 %v1337
  %v1377 = vunpack.c.l.b16 %v1338
  %v1378 = vunpack.c.l.b16 %v1339
  %v1379 = vunpack.c.l.b16 %v1340
  %v1380 = vunpack.c.l.b16 %v1341
  %v1381 = vunpack.c.l.b16 %v1342
  %v1382 = vunpack.c.l.b16 %v1343
  %v1383 = vunpack.c.l.b16 %v1344
  %v1384 = vunpack.c.l.b16 %v1345
  %v1385 = vunpack.c.l.b16 %v1346
  %v1386 = vunpack.c.l.b16 %v1347
  %v1387 = vunpack.c.l.b16 %v1348
  %v1388 = vunpack.c.l.b16 %v1349
  %v1389 = vpack.c.b16 %v1374, %v1373
  %v1390 = vpack.c.b16 %v1376, %v1375
  %v1391 = vpack.c.b16 %v1378, %v1377
  %v1392 = vpack.c.b16 %v1380, %v1379
  %v1393 = vpack.c.b16 %v1382, %v1381
  %v1394 = vpack.c.b16 %v1384, %v1383
  %v1395 = vpack.c.b16 %v1386, %v1385
  %v1396 = vpack.c.b16 %v1388, %v1387
  %1405 = vmatprep.subr.bf16.mxu0 0
  %1406 = vmatpush1.bf16.msra.mxu0 %v1396
  %1407 = vmatprep.subr.bf16.mxu0 0
  %1408 = vmatpush1.bf16.msra.mxu0 %v1395
  %1409 = vmatprep.subr.bf16.mxu0 0
  %1410 = vmatpush1.bf16.msra.mxu0 %v1394
  %1411 = vmatprep.subr.bf16.mxu0 0
  %1412 = vmatpush1.bf16.msra.mxu0 %v1393
  %1413 = vmatprep.subr.bf16.mxu0 0
  %1414 = vmatpush1.bf16.msra.mxu0 %v1392
  %1415 = vmatprep.subr.bf16.mxu0 0
  %1416 = vmatpush1.bf16.msra.mxu0 %v1391
  %1417 = vmatprep.subr.bf16.mxu0 0
  %1418 = vmatpush1.bf16.msra.mxu0 %v1390
  %1419 = vmatprep.subr.bf16.mxu0 0
  %1420 = vmatpush1.bf16.msra.mxu0 %v1389
  %1421 = vmatprep.subr.bf16.mxu0 0
  %1422 = vmatpush2.bf16.msra.mxu0 0
  %1423 = vmatprep.subr.bf16.mxu0 0
  %1424 = vmatpush2.bf16.msra.mxu0 0
  %1425 = vmatprep.subr.bf16.mxu0 0
  %1426 = vmatpush2.bf16.msra.mxu0 0
  %1427 = vmatprep.subr.bf16.mxu0 0
  %1428 = vmatpush2.bf16.msra.mxu0 0
  %1429 = vmatprep.subr.bf16.mxu0 0
  %1430 = vmatpush2.bf16.msra.mxu0 0
  %1431 = vmatprep.subr.bf16.mxu0 0
  %1432 = vmatpush2.bf16.msra.mxu0 0
  %1433 = vmatprep.subr.bf16.mxu0 0
  %1434 = vmatpush2.bf16.msra.mxu0 0
  %1435 = vmatprep.subr.bf16.mxu0 0
  %1436 = vmatpush2.bf16.msra.mxu0 0
  %1437 = vmatprep.mubr.bf16.mxu0 0
  %1438 = vmatmul.mubr.bf16.gmra.mxu0 %v1333
  %v1439 = vpop.f32.mrf.mxu0
  %v1440 = vadd.f32 %v1355, %v1439
  %v1441 = vpop.f32.mrf.mxu0
  %v1442 = vpop.f32.mrf.mxu0
  %v1443 = vpop.f32.mrf.mxu0
  %1444 = vdwg.mxu0
  %1445 = vst [vmem:[%s7] sm:$0xff] %v1440
  // Predicated region
  $region30: #{gru1_forward.1} parent=0 // pred_check
    _
  $region31: #{gru1_forward.1} parent=0 // pred_check_branch
    %1447 = sbr.rel (0) target = $region33
  $region32: #{gru1_forward.1} parent=0 // pred_region
    _
  $region33: #{gru1_forward.1} parent=0 // pred_fallthru
    _
  // Predicated region
  $region34: #{gru1_forward.1} parent=0 // pred_check
    _
  $region35: #{gru1_forward.1} parent=0 // pred_check_branch
    %1449 = sbr.rel (0) target = $region37
  $region36: #{gru1_forward.1} parent=0 // pred_region
    _
  $region37: #{gru1_forward.1} parent=0 // pred_fallthru
    _

</llo_original>
